<compile_context>
chip_gen: v5e
topology: v5e:2x2
jax: 0.10.0
libtpu: 0.0.40
codegen_flags: <defaults>
</compile_context>

<pallas_src>
import functools

import jax
import jax.numpy as jnp
from jax.experimental import pallas as pl
from jax.experimental.pallas import tpu as pltpu

N_TASKS = 1
NEG_SLOPE = 0.01          # PyTorch LeakyReLU default
IN_FEATURES = 146

TRUNK_DIMS = [(146, 50), (50, 20), (20, 20)]
HEAD_DIMS = [(20, 20), (20, 10), (10, 1)]
N_LAYERS = len(TRUNK_DIMS) + len(HEAD_DIMS)   # 6 fused layers in the kernel


def _leaky_relu(x):
    return jnp.where(x > 0, x, NEG_SLOPE * x)


def _mlp_kernel(x_ref, *refs):
    """Kernel body: 6 fused Linear(+LeakyReLU) layers on one batch tile."""
    out_ref = refs[-1]
    p = refs[:-1]                      # 6 x (weight_ref, bias_ref)

    h = x_ref[...]                     # (TILE_B, 146), compute dtype (bf16)
    for li in range(N_LAYERS):
        w = p[2 * li][...]             # (din, dout), compute dtype (bf16)
        b = p[2 * li + 1][...]         # (1, dout), f32
        h = jnp.dot(h.astype(w.dtype), w,
                    preferred_element_type=jnp.float32) + b
        if li < N_LAYERS - 1:          # no activation after the last head layer
            h = _leaky_relu(h)
    out_ref[...] = h.astype(out_ref.dtype)   # single lane-dense full-block store


def init_params(key, n_tasks=N_TASKS):
    """PyTorch-like uniform(-1/sqrt(fan_in), 1/sqrt(fan_in)) init.

    Weights are stored pre-transposed as (in, out) so kernels compute
    y = x @ W + b directly on the MXU.
    """
    def linear(k, din, dout):
        kw, kb = jax.random.split(k)
        bound = 1.0 / float(din) ** 0.5
        w = jax.random.uniform(kw, (din, dout), jnp.float32, -bound, bound)
        b = jax.random.uniform(kb, (1, dout), jnp.float32, -bound, bound)
        return w, b

    trunk = []
    for din, dout in TRUNK_DIMS:
        key, k = jax.random.split(key)
        trunk.append(linear(k, din, dout))
    heads = []
    for _ in range(n_tasks):
        task = []
        for din, dout in HEAD_DIMS:
            key, k = jax.random.split(key)
            task.append(linear(k, din, dout))
        heads.append(task)
    return {"trunk": trunk, "heads": heads}


def _block_diag(mats):
    rows = sum(m.shape[0] for m in mats)
    cols = sum(m.shape[1] for m in mats)
    out = jnp.zeros((rows, cols), mats[0].dtype)
    r = c = 0
    for m in mats:
        out = out.at[r:r + m.shape[0], c:c + m.shape[1]].set(m)
        r += m.shape[0]
        c += m.shape[1]
    return out


def _fuse_params(params, compute_dtype):
    """Flatten trunk layers and fuse all task heads into 3 wide layers.

    Head layer-1 weights are concatenated along the output dim; layers 2 and 3
    become block-diagonal, so one matmul per layer serves all tasks and the
    final layer directly produces the [batch, n_tasks] output (equivalent to
    torch.stack([head(x).squeeze() ...]).T). Exact for n_tasks >= 1 (the zero
    off-diagonal blocks contribute nothing).
    """
    heads = params["heads"]
    layers = list(params["trunk"])
    layers.append((jnp.concatenate([h[0][0] for h in heads], axis=1),
                   jnp.concatenate([h[0][1] for h in heads], axis=1)))
    layers.append((_block_diag([h[1][0] for h in heads]),
                   jnp.concatenate([h[1][1] for h in heads], axis=1)))
    layers.append((_block_diag([h[2][0] for h in heads]),
                   jnp.concatenate([h[2][1] for h in heads], axis=1)))
    flat = []
    for w, b in layers:
        flat.append(w.astype(compute_dtype))   # bf16 weights for the MXU
        flat.append(b.astype(jnp.float32))     # f32 bias (added to f32 accum)
    return flat


def _round_up(n, m):
    return ((n + m - 1) // m) * m


@functools.partial(jax.jit, static_argnames=("tile_b", "compute_dtype"))
def multitask_mlp_forward(x, params, tile_b=512, compute_dtype=jnp.bfloat16):
    batch, feat = x.shape
    n_tasks = len(params["heads"])
    flat = _fuse_params(params, compute_dtype)

    # Static tile choice (shapes are static under jit). Sublane dim must be a
    # multiple of 8 when it does not cover the full batch.
    tile_b = min(tile_b, _round_up(batch, 8))
    grid = (pl.cdiv(batch, tile_b),)

    x_spec = pl.BlockSpec((tile_b, feat), lambda i: (i, 0))
    # Parameters: full-array blocks with constant index_maps -> fetched once,
    # stay VMEM-resident across all grid steps.
    param_specs = [pl.BlockSpec(p.shape, lambda i: (0, 0)) for p in flat]
    out_spec = pl.BlockSpec((tile_b, n_tasks), lambda i: (i, 0))

    return pl.pallas_call(
        _mlp_kernel,
        out_shape=jax.ShapeDtypeStruct((batch, n_tasks), jnp.float32),
        grid=grid,
        in_specs=[x_spec] + param_specs,
        out_specs=out_spec,
        compiler_params=pltpu.CompilerParams(
            dimension_semantics=("parallel",)),   # shard batch tiles across TCs
    )(x.astype(compute_dtype), *flat)


def _reference_forward(x, params, compute_dtype=jnp.bfloat16):
    """Plain-JAX reference mirroring the PyTorch forward (and kernel numerics)."""
    def layer(h, w, b, act):
        y = jnp.dot(h.astype(compute_dtype), w.astype(compute_dtype),
                    preferred_element_type=jnp.float32) + b.astype(jnp.float32)
        return _leaky_relu(y) if act else y

    h = x
    for w, b in params["trunk"]:
        h = layer(h, w, b, True)
    cols = []
    for task in params["heads"]:
        y = h
        for li, (w, b) in enumerate(task):
            y = layer(y, w, b, li < len(task) - 1)
        cols.append(y[:, 0])
    return jnp.stack(cols).T


if __name__ == "__main__":
    key = jax.random.PRNGKey(0)
    key, kx, kp = jax.random.split(key, 3)

    batch = 512
    x = jax.random.normal(kx, (batch, IN_FEATURES), jnp.float32)
    params = init_params(kp, n_tasks=N_TASKS)

    out = multitask_mlp_forward(x, params, tile_b=128)   # 4 pipelined grid steps
    out = jax.block_until_ready(out)

    ref = _reference_forward(x, params)
    assert out.shape == (batch, N_TASKS), out.shape
    max_err = float(jnp.max(jnp.abs(out - ref)))
    assert jnp.allclose(out, ref, atol=1e-3, rtol=1e-3), max_err

    print("KERNEL_OK")
</pallas_src>

<mosaic_0001>
module attributes {stable_mosaic.version = 11 : i64} {
  func.func @_mlp_kernel(%arg0: i32, %arg1: memref<128x146xbf16, #tpu.memory_space<vmem>>, %arg2: memref<146x50xbf16, #tpu.memory_space<vmem>>, %arg3: memref<1x50xf32, #tpu.memory_space<vmem>>, %arg4: memref<50x20xbf16, #tpu.memory_space<vmem>>, %arg5: memref<1x20xf32, #tpu.memory_space<vmem>>, %arg6: memref<20x20xbf16, #tpu.memory_space<vmem>>, %arg7: memref<1x20xf32, #tpu.memory_space<vmem>>, %arg8: memref<20x20xbf16, #tpu.memory_space<vmem>>, %arg9: memref<1x20xf32, #tpu.memory_space<vmem>>, %arg10: memref<20x10xbf16, #tpu.memory_space<vmem>>, %arg11: memref<1x10xf32, #tpu.memory_space<vmem>>, %arg12: memref<10x1xbf16, #tpu.memory_space<vmem>>, %arg13: memref<1x1xf32, #tpu.memory_space<vmem>>, %arg14: memref<128x1xf32, #tpu.memory_space<vmem>>) attributes {dimension_semantics = [#tpu.dimension_semantics<parallel>], iteration_bounds = array<i64: 4>, scalar_prefetch = 0 : i64, scratch_operands = 0 : i64, tpu.core_type = #tpu.core_type<tc>, window_params = [{transform_indices = @transform_0, window_bounds = array<i64: 128, 146>}, {pipeline_mode = #tpu.pipeline_mode<synchronous>, transform_indices = @transform_1, window_bounds = array<i64: 146, 50>}, {pipeline_mode = #tpu.pipeline_mode<synchronous>, transform_indices = @transform_2, window_bounds = array<i64: 1, 50>}, {pipeline_mode = #tpu.pipeline_mode<synchronous>, transform_indices = @transform_3, window_bounds = array<i64: 50, 20>}, {pipeline_mode = #tpu.pipeline_mode<synchronous>, transform_indices = @transform_4, window_bounds = array<i64: 1, 20>}, {pipeline_mode = #tpu.pipeline_mode<synchronous>, transform_indices = @transform_5, window_bounds = array<i64: 20, 20>}, {pipeline_mode = #tpu.pipeline_mode<synchronous>, transform_indices = @transform_6, window_bounds = array<i64: 1, 20>}, {pipeline_mode = #tpu.pipeline_mode<synchronous>, transform_indices = @transform_7, window_bounds = array<i64: 20, 20>}, {pipeline_mode = #tpu.pipeline_mode<synchronous>, transform_indices = @transform_8, window_bounds = array<i64: 1, 20>}, {pipeline_mode = #tpu.pipeline_mode<synchronous>, transform_indices = @transform_9, window_bounds = array<i64: 20, 10>}, {pipeline_mode = #tpu.pipeline_mode<synchronous>, transform_indices = @transform_10, window_bounds = array<i64: 1, 10>}, {pipeline_mode = #tpu.pipeline_mode<synchronous>, transform_indices = @transform_11, window_bounds = array<i64: 10, 1>}, {pipeline_mode = #tpu.pipeline_mode<synchronous>, transform_indices = @transform_12, window_bounds = array<i64: 1, 1>}, {transform_indices = @transform_13, window_bounds = array<i64: 128, 1>}]} {
    %c0 = arith.constant 0 : index
    %c0_0 = arith.constant 0 : index
    %0 = vector.load %arg1[%c0, %c0_0] : memref<128x146xbf16, #tpu.memory_space<vmem>>, vector<128x146xbf16>
    %c0_1 = arith.constant 0 : index
    %c0_2 = arith.constant 0 : index
    %1 = vector.load %arg2[%c0_1, %c0_2] : memref<146x50xbf16, #tpu.memory_space<vmem>>, vector<146x50xbf16>
    %c0_3 = arith.constant 0 : index
    %c0_4 = arith.constant 0 : index
    %2 = vector.load %arg3[%c0_3, %c0_4] : memref<1x50xf32, #tpu.memory_space<vmem>>, vector<1x50xf32>
    %cst = arith.constant dense<0.000000e+00> : vector<128x50xf32>
    %3 = tpu.matmul %0, %1, %cst {dimension_numbers = #tpu.dot_dimension_numbers<[1], [0], [0], [1], [0, 0, 1, 1], [], []>} : vector<128x146xbf16>, vector<146x50xbf16>, vector<128x50xf32> -> vector<128x50xf32>
    %4 = vector.broadcast %2 : vector<1x50xf32> to vector<128x50xf32>
    %5 = arith.addf %3, %4 : vector<128x50xf32>
    %cst_5 = arith.constant 0.000000e+00 : f32
    %6 = vector.broadcast %cst_5 : f32 to vector<128x50xf32>
    %7 = arith.cmpf ogt, %5, %6 : vector<128x50xf32>
    %cst_6 = arith.constant 0.00999999977 : f32
    %8 = vector.broadcast %cst_6 : f32 to vector<128x50xf32>
    %9 = arith.mulf %8, %5 : vector<128x50xf32>
    %10 = arith.select %7, %5, %9 : vector<128x50xi1>, vector<128x50xf32>
    %c0_7 = arith.constant 0 : index
    %c0_8 = arith.constant 0 : index
    %11 = vector.load %arg4[%c0_7, %c0_8] : memref<50x20xbf16, #tpu.memory_space<vmem>>, vector<50x20xbf16>
    %c0_9 = arith.constant 0 : index
    %c0_10 = arith.constant 0 : index
    %12 = vector.load %arg5[%c0_9, %c0_10] : memref<1x20xf32, #tpu.memory_space<vmem>>, vector<1x20xf32>
    %13 = arith.truncf %10 : vector<128x50xf32> to vector<128x50xbf16>
    %cst_11 = arith.constant dense<0.000000e+00> : vector<128x20xf32>
    %14 = tpu.matmul %13, %11, %cst_11 {dimension_numbers = #tpu.dot_dimension_numbers<[1], [0], [0], [1], [0, 0, 1, 1], [], []>} : vector<128x50xbf16>, vector<50x20xbf16>, vector<128x20xf32> -> vector<128x20xf32>
    %15 = vector.broadcast %12 : vector<1x20xf32> to vector<128x20xf32>
    %16 = arith.addf %14, %15 : vector<128x20xf32>
    %cst_12 = arith.constant 0.000000e+00 : f32
    %17 = vector.broadcast %cst_12 : f32 to vector<128x20xf32>
    %18 = arith.cmpf ogt, %16, %17 : vector<128x20xf32>
    %cst_13 = arith.constant 0.00999999977 : f32
    %19 = vector.broadcast %cst_13 : f32 to vector<128x20xf32>
    %20 = arith.mulf %19, %16 : vector<128x20xf32>
    %21 = arith.select %18, %16, %20 : vector<128x20xi1>, vector<128x20xf32>
    %c0_14 = arith.constant 0 : index
    %c0_15 = arith.constant 0 : index
    %22 = vector.load %arg6[%c0_14, %c0_15] : memref<20x20xbf16, #tpu.memory_space<vmem>>, vector<20x20xbf16>
    %c0_16 = arith.constant 0 : index
    %c0_17 = arith.constant 0 : index
    %23 = vector.load %arg7[%c0_16, %c0_17] : memref<1x20xf32, #tpu.memory_space<vmem>>, vector<1x20xf32>
    %24 = arith.truncf %21 : vector<128x20xf32> to vector<128x20xbf16>
    %cst_18 = arith.constant dense<0.000000e+00> : vector<128x20xf32>
    %25 = tpu.matmul %24, %22, %cst_18 {dimension_numbers = #tpu.dot_dimension_numbers<[1], [0], [0], [1], [0, 0, 1, 1], [], []>} : vector<128x20xbf16>, vector<20x20xbf16>, vector<128x20xf32> -> vector<128x20xf32>
    %26 = vector.broadcast %23 : vector<1x20xf32> to vector<128x20xf32>
    %27 = arith.addf %25, %26 : vector<128x20xf32>
    %cst_19 = arith.constant 0.000000e+00 : f32
    %28 = vector.broadcast %cst_19 : f32 to vector<128x20xf32>
    %29 = arith.cmpf ogt, %27, %28 : vector<128x20xf32>
    %cst_20 = arith.constant 0.00999999977 : f32
    %30 = vector.broadcast %cst_20 : f32 to vector<128x20xf32>
    %31 = arith.mulf %30, %27 : vector<128x20xf32>
    %32 = arith.select %29, %27, %31 : vector<128x20xi1>, vector<128x20xf32>
    %c0_21 = arith.constant 0 : index
    %c0_22 = arith.constant 0 : index
    %33 = vector.load %arg8[%c0_21, %c0_22] : memref<20x20xbf16, #tpu.memory_space<vmem>>, vector<20x20xbf16>
    %c0_23 = arith.constant 0 : index
    %c0_24 = arith.constant 0 : index
    %34 = vector.load %arg9[%c0_23, %c0_24] : memref<1x20xf32, #tpu.memory_space<vmem>>, vector<1x20xf32>
    %35 = arith.truncf %32 : vector<128x20xf32> to vector<128x20xbf16>
    %cst_25 = arith.constant dense<0.000000e+00> : vector<128x20xf32>
    %36 = tpu.matmul %35, %33, %cst_25 {dimension_numbers = #tpu.dot_dimension_numbers<[1], [0], [0], [1], [0, 0, 1, 1], [], []>} : vector<128x20xbf16>, vector<20x20xbf16>, vector<128x20xf32> -> vector<128x20xf32>
    %37 = vector.broadcast %34 : vector<1x20xf32> to vector<128x20xf32>
    %38 = arith.addf %36, %37 : vector<128x20xf32>
    %cst_26 = arith.constant 0.000000e+00 : f32
    %39 = vector.broadcast %cst_26 : f32 to vector<128x20xf32>
    %40 = arith.cmpf ogt, %38, %39 : vector<128x20xf32>
    %cst_27 = arith.constant 0.00999999977 : f32
    %41 = vector.broadcast %cst_27 : f32 to vector<128x20xf32>
    %42 = arith.mulf %41, %38 : vector<128x20xf32>
    %43 = arith.select %40, %38, %42 : vector<128x20xi1>, vector<128x20xf32>
    %c0_28 = arith.constant 0 : index
    %c0_29 = arith.constant 0 : index
    %44 = vector.load %arg10[%c0_28, %c0_29] : memref<20x10xbf16, #tpu.memory_space<vmem>>, vector<20x10xbf16>
    %c0_30 = arith.constant 0 : index
    %c0_31 = arith.constant 0 : index
    %45 = vector.load %arg11[%c0_30, %c0_31] : memref<1x10xf32, #tpu.memory_space<vmem>>, vector<1x10xf32>
    %46 = arith.truncf %43 : vector<128x20xf32> to vector<128x20xbf16>
    %cst_32 = arith.constant dense<0.000000e+00> : vector<128x10xf32>
    %47 = tpu.matmul %46, %44, %cst_32 {dimension_numbers = #tpu.dot_dimension_numbers<[1], [0], [0], [1], [0, 0, 1, 1], [], []>} : vector<128x20xbf16>, vector<20x10xbf16>, vector<128x10xf32> -> vector<128x10xf32>
    %48 = vector.broadcast %45 : vector<1x10xf32> to vector<128x10xf32>
    %49 = arith.addf %47, %48 : vector<128x10xf32>
    %cst_33 = arith.constant 0.000000e+00 : f32
    %50 = vector.broadcast %cst_33 : f32 to vector<128x10xf32>
    %51 = arith.cmpf ogt, %49, %50 : vector<128x10xf32>
    %cst_34 = arith.constant 0.00999999977 : f32
    %52 = vector.broadcast %cst_34 : f32 to vector<128x10xf32>
    %53 = arith.mulf %52, %49 : vector<128x10xf32>
    %54 = arith.select %51, %49, %53 : vector<128x10xi1>, vector<128x10xf32>
    %c0_35 = arith.constant 0 : index
    %c0_36 = arith.constant 0 : index
    %55 = vector.load %arg12[%c0_35, %c0_36] : memref<10x1xbf16, #tpu.memory_space<vmem>>, vector<10x1xbf16>
    %c0_37 = arith.constant 0 : index
    %c0_38 = arith.constant 0 : index
    %56 = vector.load %arg13[%c0_37, %c0_38] : memref<1x1xf32, #tpu.memory_space<vmem>>, vector<1x1xf32>
    %57 = arith.truncf %54 : vector<128x10xf32> to vector<128x10xbf16>
    %cst_39 = arith.constant dense<0.000000e+00> : vector<128x1xf32>
    %58 = tpu.matmul %57, %55, %cst_39 {dimension_numbers = #tpu.dot_dimension_numbers<[1], [0], [0], [1], [0, 0, 1, 1], [], []>} : vector<128x10xbf16>, vector<10x1xbf16>, vector<128x1xf32> -> vector<128x1xf32>
    %59 = vector.broadcast %56 : vector<1x1xf32> to vector<128x1xf32>
    %60 = arith.addf %58, %59 : vector<128x1xf32>
    %c0_40 = arith.constant 0 : index
    %c0_41 = arith.constant 0 : index
    %61 = vector.load %arg14[%c0_40, %c0_41] : memref<128x1xf32, #tpu.memory_space<vmem>>, vector<128x1xf32>
    tpu.vector_store %arg14[%c0_40, %c0_41], %60 {strides = array<i32>} : memref<128x1xf32, #tpu.memory_space<vmem>>, vector<128x1xf32>,
    return
  }
  func.func @transform_0(%arg0: i32) -> (i32, i32) {
    %c0_i32 = arith.constant 0 : i32
    %c0_i32_0 = arith.constant 0 : i32
    return %arg0, %c0_i32 : i32, i32
  }
  func.func @transform_1(%arg0: i32) -> (i32, i32) {
    %c0_i32 = arith.constant 0 : i32
    %c0_i32_0 = arith.constant 0 : i32
    %c0_i32_1 = arith.constant 0 : i32
    return %c0_i32, %c0_i32_0 : i32, i32
  }
  func.func @transform_2(%arg0: i32) -> (i32, i32) {
    %c0_i32 = arith.constant 0 : i32
    %c0_i32_0 = arith.constant 0 : i32
    %c0_i32_1 = arith.constant 0 : i32
    return %c0_i32, %c0_i32_0 : i32, i32
  }
  func.func @transform_3(%arg0: i32) -> (i32, i32) {
    %c0_i32 = arith.constant 0 : i32
    %c0_i32_0 = arith.constant 0 : i32
    %c0_i32_1 = arith.constant 0 : i32
    return %c0_i32, %c0_i32_0 : i32, i32
  }
  func.func @transform_4(%arg0: i32) -> (i32, i32) {
    %c0_i32 = arith.constant 0 : i32
    %c0_i32_0 = arith.constant 0 : i32
    %c0_i32_1 = arith.constant 0 : i32
    return %c0_i32, %c0_i32_0 : i32, i32
  }
  func.func @transform_5(%arg0: i32) -> (i32, i32) {
    %c0_i32 = arith.constant 0 : i32
    %c0_i32_0 = arith.constant 0 : i32
    %c0_i32_1 = arith.constant 0 : i32
    return %c0_i32, %c0_i32_0 : i32, i32
  }
  func.func @transform_6(%arg0: i32) -> (i32, i32) {
    %c0_i32 = arith.constant 0 : i32
    %c0_i32_0 = arith.constant 0 : i32
    %c0_i32_1 = arith.constant 0 : i32
    return %c0_i32, %c0_i32_0 : i32, i32
  }
  func.func @transform_7(%arg0: i32) -> (i32, i32) {
    %c0_i32 = arith.constant 0 : i32
    %c0_i32_0 = arith.constant 0 : i32
    %c0_i32_1 = arith.constant 0 : i32
    return %c0_i32, %c0_i32_0 : i32, i32
  }
  func.func @transform_8(%arg0: i32) -> (i32, i32) {
    %c0_i32 = arith.constant 0 : i32
    %c0_i32_0 = arith.constant 0 : i32
    %c0_i32_1 = arith.constant 0 : i32
    return %c0_i32, %c0_i32_0 : i32, i32
  }
  func.func @transform_9(%arg0: i32) -> (i32, i32) {
    %c0_i32 = arith.constant 0 : i32
    %c0_i32_0 = arith.constant 0 : i32
    %c0_i32_1 = arith.constant 0 : i32
    return %c0_i32, %c0_i32_0 : i32, i32
  }
  func.func @transform_10(%arg0: i32) -> (i32, i32) {
    %c0_i32 = arith.constant 0 : i32
    %c0_i32_0 = arith.constant 0 : i32
    %c0_i32_1 = arith.constant 0 : i32
    return %c0_i32, %c0_i32_0 : i32, i32
  }
  func.func @transform_11(%arg0: i32) -> (i32, i32) {
    %c0_i32 = arith.constant 0 : i32
    %c0_i32_0 = arith.constant 0 : i32
    %c0_i32_1 = arith.constant 0 : i32
    return %c0_i32, %c0_i32_0 : i32, i32
  }
  func.func @transform_12(%arg0: i32) -> (i32, i32) {
    %c0_i32 = arith.constant 0 : i32
    %c0_i32_0 = arith.constant 0 : i32
    %c0_i32_1 = arith.constant 0 : i32
    return %c0_i32, %c0_i32_0 : i32, i32
  }
  func.func @transform_13(%arg0: i32) -> (i32, i32) {
    %c0_i32 = arith.constant 0 : i32
    %c0_i32_0 = arith.constant 0 : i32
    return %arg0, %c0_i32 : i32, i32
  }
}

</mosaic_0001>

<llo_original>
// kernel: multitask_mlp_forward.1
$region0: #{multitask_mlp_forward.1}
  #allocation0 [shape = 'u32[]', space=smem, size = 0x4, offset = 0x4, fixed_abs, tag = 'smem constant byte address 0x4 - core index']
  #allocation1 [shape = 'u32[72,128]{1,0:T(1,128)}', space=vmem, size = 0x9000, scoped, tag = 'internal scratch']
  #allocation2 [shape = 'f32[1,1]{1,0:T(1,128)S(1)}', space=vmem, size = 0x200, scoped, tag = 'scoped memory for multitask_mlp_forward.1']
  %s0 = inlined_call_operand.vmem [shape: bf16[512,146], index: 0, kind: input, shape index: {}]
  %s1 = inlined_call_operand.vmem [shape: bf16[146,50], index: 1, kind: input, shape index: {}]
  %s2 = inlined_call_operand.vmem [shape: f32[1,50], index: 2, kind: input, shape index: {}]
  %s3 = inlined_call_operand.vmem [shape: bf16[50,20], index: 3, kind: input, shape index: {}]
  %s4 = inlined_call_operand.vmem [shape: f32[1,20], index: 4, kind: input, shape index: {}]
  %s5 = inlined_call_operand.vmem [shape: bf16[20,20], index: 5, kind: input, shape index: {}]
  %s6 = inlined_call_operand.vmem [shape: f32[1,20], index: 6, kind: input, shape index: {}]
  %s7 = inlined_call_operand.vmem [shape: bf16[20,20], index: 7, kind: input, shape index: {}]
  %s8 = inlined_call_operand.vmem [shape: f32[1,20], index: 8, kind: input, shape index: {}]
  %s9 = inlined_call_operand.vmem [shape: bf16[20,10], index: 9, kind: input, shape index: {}]
  %s10 = inlined_call_operand.vmem [shape: f32[1,10], index: 10, kind: input, shape index: {}]
  %s11 = inlined_call_operand.vmem [shape: bf16[10,1], index: 11, kind: input, shape index: {}]
  %s12 = inlined_call_operand.<no memory space> [shape: f32[1,1], index: 12, kind: input, shape index: {}]
  %s13 = inlined_call_operand.vmem [shape: f32[512,1], index: 13, kind: output, shape index: {}]
  %s14 = sld [smem:[#allocation0]]
  $region85: #{multitask_mlp_forward.1} parent=0
    _
  %s16 = ssub.s32 1, %s14
  %s17 = scalar_select 0, %s16, %s14
  %v18 = vstv %s12
  %19 = vst [vmem:[#allocation2] sm:$0x1] %v18
  loop: start=0, step=1, limit=6
  $region2: #{multitask_mlp_forward.1} parent=0 // loop_pre_header
    _
  $region3: #{multitask_mlp_forward.1} parent=0 // loop_header
    %s21 = sphi 0, %s25
    %p22 = scmp.ge.s32.totalorder %s21, 6
    %s31 = sphi 0, %s33
    %s34 = sphi 0, %s31
    %s35 = sphi 0, %s34
    %s51 = sphi 0, %s35
    %s55 = sphi 0, %s55
    %s57 = sphi 0, %s55
    %s58 = sphi 0, %s57
    %s72 = sphi 0, %s58
    %s76 = sphi 0, %s76
    %s78 = sphi 0, %s76
    %s79 = sphi 0, %s78
    %s93 = sphi 0, %s79
    %s97 = sphi 0, %s97
    %s99 = sphi 0, %s97
    %s100 = sphi 0, %s99
    %s114 = sphi 0, %s100
    %s118 = sphi 0, %s118
    %s120 = sphi 0, %s118
    %s121 = sphi 0, %s120
    %s135 = sphi 0, %s121
    %s139 = sphi 0, %s139
    %s141 = sphi 0, %s139
    %s142 = sphi 0, %s141
    %s156 = sphi 0, %s142
    %s160 = sphi 0, %s160
    %s162 = sphi 0, %s160
    %s163 = sphi 0, %s162
    %s177 = sphi 0, %s163
    %s181 = sphi 0, %s181
    %s183 = sphi 0, %s181
    %s184 = sphi 0, %s183
    %s198 = sphi 0, %s184
    %s202 = sphi 0, %s202
    %s204 = sphi 0, %s202
    %s205 = sphi 0, %s204
    %s219 = sphi 0, %s205
    %s223 = sphi 0, %s223
    %s225 = sphi 0, %s223
    %s226 = sphi 0, %s225
    %s240 = sphi 0, %s226
    %s244 = sphi 0, %s244
    %s246 = sphi 0, %s244
    %s247 = sphi 0, %s246
    %s261 = sphi 0, %s247
    %s265 = sphi 0, %s265
    %s267 = sphi 0, %s265
    %s268 = sphi 0, %s267
    %s282 = sphi 0, %s268
    %s286 = sphi 0, %s286
    %s288 = sphi 0, %s286
    %s289 = sphi 0, %s288
    %s303 = sphi 0, %s289
    %s309 = sphi 0, %s311
    %s312 = sphi 0, %s309
    %s313 = sphi 0, %s312
    %s329 = sphi 0, %s313
  $region4: #{multitask_mlp_forward.1} parent=0 // loop_header_branch
    %24 = sbr.rel (%p22) target = $region8
  $region5: #{multitask_mlp_forward.1} parent=0 // loop_body
    %s26 = ssub.s32 %s21, 1
    %s27 = ssub.s32 %s21, 2
    %s28 = sadd.s32 %s21, 1
    %s29 = ssub.s32 %s21, %s28
    %p30 = scmp.eq.s32.totalorder %s29, 0
    %s32 = sadd.s32 %s31, 1
    %s33 = scalar_select %p30, %s31, %s32
    %p36 = pneg %p30
    %p37 = scmp.eq.s32.totalorder %s21, 3
    %p38 = por %p36, %p37
    %p39 = scmp.ne.s32.totalorder %s31, %s34
    %p40 = scmp.eq.s32.totalorder %s21, 0
    %p41 = por %p39, %p40
    %p42 = scmp.ne.s32.totalorder %s31, %s34
    %p43 = scmp.eq.s32.totalorder %s26, 3
    %p44 = por %p42, %p43
    %p45 = scmp.ne.s32.totalorder %s34, %s35
    %p46 = scmp.eq.s32.totalorder %s26, 0
    %p47 = por %p45, %p46
    %p48 = scmp.ne.s32.totalorder %s34, %s35
    %p49 = scmp.eq.s32.totalorder %s27, 3
    %p50 = por %p48, %p49
    %p52 = scmp.ne.s32.totalorder %s35, %s51
    %p53 = scmp.eq.s32.totalorder %s27, 0
    %p54 = por %p52, %p53
    %s56 = sadd.s32 %s55, 1
    %p59 = scmp.eq.s32.totalorder %s21, 3
    %p60 = scmp.ne.s32.totalorder %s55, %s57
    %p61 = scmp.eq.s32.totalorder %s21, 0
    %p62 = por %p60, %p61
    %p63 = scmp.ne.s32.totalorder %s55, %s57
    %p64 = scmp.eq.s32.totalorder %s26, 3
    %p65 = por %p63, %p64
    %p66 = scmp.ne.s32.totalorder %s57, %s58
    %p67 = scmp.eq.s32.totalorder %s26, 0
    %p68 = por %p66, %p67
    %p69 = scmp.ne.s32.totalorder %s57, %s58
    %p70 = scmp.eq.s32.totalorder %s27, 3
    %p71 = por %p69, %p70
    %p73 = scmp.ne.s32.totalorder %s58, %s72
    %p74 = scmp.eq.s32.totalorder %s27, 0
    %p75 = por %p73, %p74
    %s77 = sadd.s32 %s76, 1
    %p80 = scmp.eq.s32.totalorder %s21, 3
    %p81 = scmp.ne.s32.totalorder %s76, %s78
    %p82 = scmp.eq.s32.totalorder %s21, 0
    %p83 = por %p81, %p82
    %p84 = scmp.ne.s32.totalorder %s76, %s78
    %p85 = scmp.eq.s32.totalorder %s26, 3
    %p86 = por %p84, %p85
    %p87 = scmp.ne.s32.totalorder %s78, %s79
    %p88 = scmp.eq.s32.totalorder %s26, 0
    %p89 = por %p87, %p88
    %p90 = scmp.ne.s32.totalorder %s78, %s79
    %p91 = scmp.eq.s32.totalorder %s27, 3
    %p92 = por %p90, %p91
    %p94 = scmp.ne.s32.totalorder %s79, %s93
    %p95 = scmp.eq.s32.totalorder %s27, 0
    %p96 = por %p94, %p95
    %s98 = sadd.s32 %s97, 1
    %p101 = scmp.eq.s32.totalorder %s21, 3
    %p102 = scmp.ne.s32.totalorder %s97, %s99
    %p103 = scmp.eq.s32.totalorder %s21, 0
    %p104 = por %p102, %p103
    %p105 = scmp.ne.s32.totalorder %s97, %s99
    %p106 = scmp.eq.s32.totalorder %s26, 3
    %p107 = por %p105, %p106
    %p108 = scmp.ne.s32.totalorder %s99, %s100
    %p109 = scmp.eq.s32.totalorder %s26, 0
    %p110 = por %p108, %p109
    %p111 = scmp.ne.s32.totalorder %s99, %s100
    %p112 = scmp.eq.s32.totalorder %s27, 3
    %p113 = por %p111, %p112
    %p115 = scmp.ne.s32.totalorder %s100, %s114
    %p116 = scmp.eq.s32.totalorder %s27, 0
    %p117 = por %p115, %p116
    %s119 = sadd.s32 %s118, 1
    %p122 = scmp.eq.s32.totalorder %s21, 3
    %p123 = scmp.ne.s32.totalorder %s118, %s120
    %p124 = scmp.eq.s32.totalorder %s21, 0
    %p125 = por %p123, %p124
    %p126 = scmp.ne.s32.totalorder %s118, %s120
    %p127 = scmp.eq.s32.totalorder %s26, 3
    %p128 = por %p126, %p127
    %p129 = scmp.ne.s32.totalorder %s120, %s121
    %p130 = scmp.eq.s32.totalorder %s26, 0
    %p131 = por %p129, %p130
    %p132 = scmp.ne.s32.totalorder %s120, %s121
    %p133 = scmp.eq.s32.totalorder %s27, 3
    %p134 = por %p132, %p133
    %p136 = scmp.ne.s32.totalorder %s121, %s135
    %p137 = scmp.eq.s32.totalorder %s27, 0
    %p138 = por %p136, %p137
    %s140 = sadd.s32 %s139, 1
    %p143 = scmp.eq.s32.totalorder %s21, 3
    %p144 = scmp.ne.s32.totalorder %s139, %s141
    %p145 = scmp.eq.s32.totalorder %s21, 0
    %p146 = por %p144, %p145
    %p147 = scmp.ne.s32.totalorder %s139, %s141
    %p148 = scmp.eq.s32.totalorder %s26, 3
    %p149 = por %p147, %p148
    %p150 = scmp.ne.s32.totalorder %s141, %s142
    %p151 = scmp.eq.s32.totalorder %s26, 0
    %p152 = por %p150, %p151
    %p153 = scmp.ne.s32.totalorder %s141, %s142
    %p154 = scmp.eq.s32.totalorder %s27, 3
    %p155 = por %p153, %p154
    %p157 = scmp.ne.s32.totalorder %s142, %s156
    %p158 = scmp.eq.s32.totalorder %s27, 0
    %p159 = por %p157, %p158
    %s161 = sadd.s32 %s160, 1
    %p164 = scmp.eq.s32.totalorder %s21, 3
    %p165 = scmp.ne.s32.totalorder %s160, %s162
    %p166 = scmp.eq.s32.totalorder %s21, 0
    %p167 = por %p165, %p166
    %p168 = scmp.ne.s32.totalorder %s160, %s162
    %p169 = scmp.eq.s32.totalorder %s26, 3
    %p170 = por %p168, %p169
    %p171 = scmp.ne.s32.totalorder %s162, %s163
    %p172 = scmp.eq.s32.totalorder %s26, 0
    %p173 = por %p171, %p172
    %p174 = scmp.ne.s32.totalorder %s162, %s163
    %p175 = scmp.eq.s32.totalorder %s27, 3
    %p176 = por %p174, %p175
    %p178 = scmp.ne.s32.totalorder %s163, %s177
    %p179 = scmp.eq.s32.totalorder %s27, 0
    %p180 = por %p178, %p179
    %s182 = sadd.s32 %s181, 1
    %p185 = scmp.eq.s32.totalorder %s21, 3
    %p186 = scmp.ne.s32.totalorder %s181, %s183
    %p187 = scmp.eq.s32.totalorder %s21, 0
    %p188 = por %p186, %p187
    %p189 = scmp.ne.s32.totalorder %s181, %s183
    %p190 = scmp.eq.s32.totalorder %s26, 3
    %p191 = por %p189, %p190
    %p192 = scmp.ne.s32.totalorder %s183, %s184
    %p193 = scmp.eq.s32.totalorder %s26, 0
    %p194 = por %p192, %p193
    %p195 = scmp.ne.s32.totalorder %s183, %s184
    %p196 = scmp.eq.s32.totalorder %s27, 3
    %p197 = por %p195, %p196
    %p199 = scmp.ne.s32.totalorder %s184, %s198
    %p200 = scmp.eq.s32.totalorder %s27, 0
    %p201 = por %p199, %p200
    %s203 = sadd.s32 %s202, 1
    %p206 = scmp.eq.s32.totalorder %s21, 3
    %p207 = scmp.ne.s32.totalorder %s202, %s204
    %p208 = scmp.eq.s32.totalorder %s21, 0
    %p209 = por %p207, %p208
    %p210 = scmp.ne.s32.totalorder %s202, %s204
    %p211 = scmp.eq.s32.totalorder %s26, 3
    %p212 = por %p210, %p211
    %p213 = scmp.ne.s32.totalorder %s204, %s205
    %p214 = scmp.eq.s32.totalorder %s26, 0
    %p215 = por %p213, %p214
    %p216 = scmp.ne.s32.totalorder %s204, %s205
    %p217 = scmp.eq.s32.totalorder %s27, 3
    %p218 = por %p216, %p217
    %p220 = scmp.ne.s32.totalorder %s205, %s219
    %p221 = scmp.eq.s32.totalorder %s27, 0
    %p222 = por %p220, %p221
    %s224 = sadd.s32 %s223, 1
    %p227 = scmp.eq.s32.totalorder %s21, 3
    %p228 = scmp.ne.s32.totalorder %s223, %s225
    %p229 = scmp.eq.s32.totalorder %s21, 0
    %p230 = por %p228, %p229
    %p231 = scmp.ne.s32.totalorder %s223, %s225
    %p232 = scmp.eq.s32.totalorder %s26, 3
    %p233 = por %p231, %p232
    %p234 = scmp.ne.s32.totalorder %s225, %s226
    %p235 = scmp.eq.s32.totalorder %s26, 0
    %p236 = por %p234, %p235
    %p237 = scmp.ne.s32.totalorder %s225, %s226
    %p238 = scmp.eq.s32.totalorder %s27, 3
    %p239 = por %p237, %p238
    %p241 = scmp.ne.s32.totalorder %s226, %s240
    %p242 = scmp.eq.s32.totalorder %s27, 0
    %p243 = por %p241, %p242
    %s245 = sadd.s32 %s244, 1
    %p248 = scmp.eq.s32.totalorder %s21, 3
    %p249 = scmp.ne.s32.totalorder %s244, %s246
    %p250 = scmp.eq.s32.totalorder %s21, 0
    %p251 = por %p249, %p250
    %p252 = scmp.ne.s32.totalorder %s244, %s246
    %p253 = scmp.eq.s32.totalorder %s26, 3
    %p254 = por %p252, %p253
    %p255 = scmp.ne.s32.totalorder %s246, %s247
    %p256 = scmp.eq.s32.totalorder %s26, 0
    %p257 = por %p255, %p256
    %p258 = scmp.ne.s32.totalorder %s246, %s247
    %p259 = scmp.eq.s32.totalorder %s27, 3
    %p260 = por %p258, %p259
    %p262 = scmp.ne.s32.totalorder %s247, %s261
    %p263 = scmp.eq.s32.totalorder %s27, 0
    %p264 = por %p262, %p263
    %s266 = sadd.s32 %s265, 1
    %p269 = scmp.eq.s32.totalorder %s21, 3
    %p270 = scmp.ne.s32.totalorder %s265, %s267
    %p271 = scmp.eq.s32.totalorder %s21, 0
    %p272 = por %p270, %p271
    %p273 = scmp.ne.s32.totalorder %s265, %s267
    %p274 = scmp.eq.s32.totalorder %s26, 3
    %p275 = por %p273, %p274
    %p276 = scmp.ne.s32.totalorder %s267, %s268
    %p277 = scmp.eq.s32.totalorder %s26, 0
    %p278 = por %p276, %p277
    %p279 = scmp.ne.s32.totalorder %s267, %s268
    %p280 = scmp.eq.s32.totalorder %s27, 3
    %p281 = por %p279, %p280
    %p283 = scmp.ne.s32.totalorder %s268, %s282
    %p284 = scmp.eq.s32.totalorder %s27, 0
    %p285 = por %p283, %p284
    %s287 = sadd.s32 %s286, 1
    %p290 = scmp.eq.s32.totalorder %s21, 3
    %p291 = scmp.ne.s32.totalorder %s286, %s288
    %p292 = scmp.eq.s32.totalorder %s21, 0
    %p293 = por %p291, %p292
    %p294 = scmp.ne.s32.totalorder %s286, %s288
    %p295 = scmp.eq.s32.totalorder %s26, 3
    %p296 = por %p294, %p295
    %p297 = scmp.ne.s32.totalorder %s288, %s289
    %p298 = scmp.eq.s32.totalorder %s26, 0
    %p299 = por %p297, %p298
    %p300 = scmp.ne.s32.totalorder %s288, %s289
    %p301 = scmp.eq.s32.totalorder %s27, 3
    %p302 = por %p300, %p301
    %p304 = scmp.ne.s32.totalorder %s289, %s303
    %p305 = scmp.eq.s32.totalorder %s27, 0
    %p306 = por %p304, %p305
    %s307 = ssub.s32 %s21, %s28
    %p308 = scmp.eq.s32.totalorder %s307, 0
    %s310 = sadd.s32 %s309, 1
    %s311 = scalar_select %p308, %s309, %s310
    %p314 = pneg %p308
    %p315 = scmp.eq.s32.totalorder %s21, 3
    %p316 = por %p314, %p315
    %p317 = scmp.ne.s32.totalorder %s309, %s312
    %p318 = scmp.eq.s32.totalorder %s21, 0
    %p319 = por %p317, %p318
    %p320 = scmp.ne.s32.totalorder %s309, %s312
    %p321 = scmp.eq.s32.totalorder %s26, 3
    %p322 = por %p320, %p321
    %p323 = scmp.ne.s32.totalorder %s312, %s313
    %p324 = scmp.eq.s32.totalorder %s26, 0
    %p325 = por %p323, %p324
    %p326 = scmp.ne.s32.totalorder %s312, %s313
    %p327 = scmp.eq.s32.totalorder %s27, 3
    %p328 = por %p326, %p327
    %p330 = scmp.ne.s32.totalorder %s313, %s329
    %p331 = scmp.eq.s32.totalorder %s27, 0
    %p332 = por %p330, %p331
    %p333 = scmp.le.s32.totalorder 1, %s21
    %p334 = scmp.lt.s32.totalorder %s21, 5
    %p335 = pnand %p333, %p334
    %p336 = pneg %p335
    // Predicated region
    $region9: #{multitask_mlp_forward.1} parent=5 // pred_check
      _
    $region10: #{multitask_mlp_forward.1} parent=5 // pred_check_branch
      %338 = sbr.rel (%p335) target = $region12
    $region11: #{multitask_mlp_forward.1} parent=5 // pred_region
      %s339 = ssub.s32 %s21, 1
      // Predicated region
      $region13: #{multitask_mlp_forward.1} parent=11 // pred_check
        %p340 = pneg %p68
      $region14: #{multitask_mlp_forward.1} parent=11 // pred_check_branch
        %342 = sbr.rel (%p340) target = $region16
      $region15: #{multitask_mlp_forward.1} parent=11 // pred_region
        _
      $region16: #{multitask_mlp_forward.1} parent=11 // pred_fallthru
        _
      // Predicated region
      $region17: #{multitask_mlp_forward.1} parent=11 // pred_check
        %p343 = pneg %p89
      $region18: #{multitask_mlp_forward.1} parent=11 // pred_check_branch
        %345 = sbr.rel (%p343) target = $region20
      $region19: #{multitask_mlp_forward.1} parent=11 // pred_region
        _
      $region20: #{multitask_mlp_forward.1} parent=11 // pred_fallthru
        _
      // Predicated region
      $region21: #{multitask_mlp_forward.1} parent=11 // pred_check
        %p346 = pneg %p110
      $region22: #{multitask_mlp_forward.1} parent=11 // pred_check_branch
        %348 = sbr.rel (%p346) target = $region24
      $region23: #{multitask_mlp_forward.1} parent=11 // pred_region
        _
      $region24: #{multitask_mlp_forward.1} parent=11 // pred_fallthru
        _
      // Predicated region
      $region25: #{multitask_mlp_forward.1} parent=11 // pred_check
        %p349 = pneg %p131
      $region26: #{multitask_mlp_forward.1} parent=11 // pred_check_branch
        %351 = sbr.rel (%p349) target = $region28
      $region27: #{multitask_mlp_forward.1} parent=11 // pred_region
        _
      $region28: #{multitask_mlp_forward.1} parent=11 // pred_fallthru
        _
      // Predicated region
      $region29: #{multitask_mlp_forward.1} parent=11 // pred_check
        %p352 = pneg %p152
      $region30: #{multitask_mlp_forward.1} parent=11 // pred_check_branch
        %354 = sbr.rel (%p352) target = $region32
      $region31: #{multitask_mlp_forward.1} parent=11 // pred_region
        _
      $region32: #{multitask_mlp_forward.1} parent=11 // pred_fallthru
        _
      // Predicated region
      $region33: #{multitask_mlp_forward.1} parent=11 // pred_check
        %p355 = pneg %p173
      $region34: #{multitask_mlp_forward.1} parent=11 // pred_check_branch
        %357 = sbr.rel (%p355) target = $region36
      $region35: #{multitask_mlp_forward.1} parent=11 // pred_region
        _
      $region36: #{multitask_mlp_forward.1} parent=11 // pred_fallthru
        _
      // Predicated region
      $region37: #{multitask_mlp_forward.1} parent=11 // pred_check
        %p358 = pneg %p194
      $region38: #{multitask_mlp_forward.1} parent=11 // pred_check_branch
        %360 = sbr.rel (%p358) target = $region40
      $region39: #{multitask_mlp_forward.1} parent=11 // pred_region
        _
      $region40: #{multitask_mlp_forward.1} parent=11 // pred_fallthru
        _
      // Predicated region
      $region41: #{multitask_mlp_forward.1} parent=11 // pred_check
        %p361 = pneg %p215
      $region42: #{multitask_mlp_forward.1} parent=11 // pred_check_branch
        %363 = sbr.rel (%p361) target = $region44
      $region43: #{multitask_mlp_forward.1} parent=11 // pred_region
        _
      $region44: #{multitask_mlp_forward.1} parent=11 // pred_fallthru
        _
      // Predicated region
      $region45: #{multitask_mlp_forward.1} parent=11 // pred_check
        %p364 = pneg %p236
      $region46: #{multitask_mlp_forward.1} parent=11 // pred_check_branch
        %366 = sbr.rel (%p364) target = $region48
      $region47: #{multitask_mlp_forward.1} parent=11 // pred_region
        _
      $region48: #{multitask_mlp_forward.1} parent=11 // pred_fallthru
        _
      // Predicated region
      $region49: #{multitask_mlp_forward.1} parent=11 // pred_check
        %p367 = pneg %p257
      $region50: #{multitask_mlp_forward.1} parent=11 // pred_check_branch
        %369 = sbr.rel (%p367) target = $region52
      $region51: #{multitask_mlp_forward.1} parent=11 // pred_region
        _
      $region52: #{multitask_mlp_forward.1} parent=11 // pred_fallthru
        _
      // Predicated region
      $region53: #{multitask_mlp_forward.1} parent=11 // pred_check
        %p370 = pneg %p278
      $region54: #{multitask_mlp_forward.1} parent=11 // pred_check_branch
        %372 = sbr.rel (%p370) target = $region56
      $region55: #{multitask_mlp_forward.1} parent=11 // pred_region
        _
      $region56: #{multitask_mlp_forward.1} parent=11 // pred_fallthru
        _
      // Predicated region
      $region57: #{multitask_mlp_forward.1} parent=11 // pred_check
        %p373 = pneg %p299
      $region58: #{multitask_mlp_forward.1} parent=11 // pred_check_branch
        %375 = sbr.rel (%p373) target = $region60
      $region59: #{multitask_mlp_forward.1} parent=11 // pred_region
        _
      $region60: #{multitask_mlp_forward.1} parent=11 // pred_fallthru
        _
    $region12: #{multitask_mlp_forward.1} parent=5 // pred_fallthru
      _
    %p376 = scmp.lt.s32.totalorder %s21, 4
    // Predicated region
    $region61: #{multitask_mlp_forward.1} parent=5 // pred_check
      %p377 = pneg %p376
    $region62: #{multitask_mlp_forward.1} parent=5 // pred_check_branch
      %379 = sbr.rel (%p377) target = $region64
    $region63: #{multitask_mlp_forward.1} parent=5 // pred_region
      // Predicated region
      $region65: #{multitask_mlp_forward.1} parent=63 // pred_check
        %p380 = pneg %p41
      $region66: #{multitask_mlp_forward.1} parent=63 // pred_check_branch
        %382 = sbr.rel (%p380) target = $region68
      $region67: #{multitask_mlp_forward.1} parent=63 // pred_region
        %s383 = smul.u32 16, %s21
        %p384 = scmp.lt.s32.totalorder %s383, 63
        %s385 = scalar_select %p384, %s383, 63
        %s386 = smul.addr %s385, 2
        %s387 = smul.addr %s386, 4
        %s388 = scalar_lea.vmem %s0, %s387
        %s389 = smul.u32 16, %s21
      $region68: #{multitask_mlp_forward.1} parent=63 // pred_fallthru
        _
    $region64: #{multitask_mlp_forward.1} parent=5 // pred_fallthru
      _
    %p390 = scmp.le.s32.totalorder 1, %s21
    %p391 = scmp.lt.s32.totalorder %s21, 5
    %p392 = pnand %p390, %p391
    %p393 = pneg %p392
    // Predicated region
    $region69: #{multitask_mlp_forward.1} parent=5 // pred_check
      _
    $region70: #{multitask_mlp_forward.1} parent=5 // pred_check_branch
      %395 = sbr.rel (%p392) target = $region72
    $region71: #{multitask_mlp_forward.1} parent=5 // pred_region
      %s396 = ssub.s32 %s21, 1
      %s397 = smul.u32 16, %s26
      %p398 = scmp.lt.s32.totalorder %s397, 63
      %s399 = scalar_select %p398, %s397, 63
      %s400 = smul.addr %s399, 2
      %s401 = smul.addr %s400, 4
      %s402 = scalar_lea.vmem %s0, %s401
      %p403 = pneg %p47
      %p404 = pneg %p44
      %p405 = pneg %p68
      %p406 = pneg %p65
      %p407 = pneg %p89
      %p408 = pneg %p86
      %p409 = pneg %p110
      %p410 = pneg %p107
      %p411 = pneg %p131
      %p412 = pneg %p128
      %p413 = pneg %p152
      %p414 = pneg %p149
      %p415 = pneg %p173
      %p416 = pneg %p170
      %p417 = pneg %p194
      %p418 = pneg %p191
      %p419 = pneg %p215
      %p420 = pneg %p212
      %p421 = pneg %p236
      %p422 = pneg %p233
      %p423 = pneg %p257
      %p424 = pneg %p254
      %p425 = pneg %p278
      %p426 = pneg %p275
      %p427 = pneg %p299
      %p428 = pneg %p296
      %p429 = pneg %p325
      %p430 = pneg %p322
      %s431 = smul.u32 16, %s26
      %p432 = scmp.lt.s32.totalorder %s431, 63
      %s433 = scalar_select %p432, %s431, 63
      %s434 = smul.addr %s433, 8
      %s435 = scalar_lea.vmem %s13, %s434
      %s436 = smul.u32 16, %s26
      %p437 = scmp.lt.s32.totalorder %s436, 63
      %s438 = scalar_select %p437, %s436, 63
      %s439 = smul.addr %s438, 2
      %s440 = smul.addr %s439, 4
      %s441 = scalar_lea.vmem %s0, %s440
      %s442 = smul.u32 16, %s26
      %s443 = smul.u32 16, %s26
      %p444 = scmp.lt.s32.totalorder %s443, 63
      %s445 = scalar_select %p444, %s443, 63
      %s446 = smul.addr %s445, 8
      %s447 = scalar_lea.vmem %s13, %s446
      %s448 = smul.u32 16, %s26
      %v450 = vld [vmem:[%s441] sm:$0xff]
      %v451 = vld [vmem:[%s441 + $0x8] sm:$0xff]
      %v452 = vld [vmem:[%s441 + $0x10] sm:$0xff]
      %v453 = vld [vmem:[%s441 + $0x18] sm:$0xff]
      %v454 = vld [vmem:[%s441 + $0x20] sm:$0xff]
      %v455 = vld [vmem:[%s441 + $0x28] sm:$0xff]
      %v456 = vld [vmem:[%s441 + $0x30] sm:$0xff]
      %v457 = vld [vmem:[%s441 + $0x38] sm:$0xff]
      %v458 = vld [vmem:[%s441 + $0x40] sm:$0xff]
      %v459 = vld [vmem:[%s441 + $0x48] sm:$0xff]
      %v460 = vld [vmem:[%s441 + $0x50] sm:$0xff]
      %v461 = vld [vmem:[%s441 + $0x58] sm:$0xff]
      %v462 = vld [vmem:[%s441 + $0x60] sm:$0xff]
      %v463 = vld [vmem:[%s441 + $0x68] sm:$0xff]
      %v464 = vld [vmem:[%s441 + $0x70] sm:$0xff]
      %v465 = vld [vmem:[%s441 + $0x78] sm:$0xff]
      %v466 = vld [vmem:[%s1] sm:$0xf]
      %v467 = vld [vmem:[%s1 + $0x4] sm:$0xf]
      %v468 = vld [vmem:[%s1 + $0x8] sm:$0xf]
      %v469 = vld [vmem:[%s1 + $0xc] sm:$0xf]
      %v470 = vld [vmem:[%s1 + $0x10] sm:$0xf]
      %v471 = vld [vmem:[%s1 + $0x14] sm:$0xf]
      %v472 = vld [vmem:[%s1 + $0x18] sm:$0xf]
      %v473 = vld [vmem:[%s1 + $0x1c] sm:$0xf]
      %v474 = vld [vmem:[%s1 + $0x20] sm:$0xf]
      %v475 = vld [vmem:[%s1 + $0x24] sm:$0xf]
      %v476 = vld [vmem:[%s1 + $0x28] sm:$0xf]
      %v477 = vld [vmem:[%s1 + $0x2c] sm:$0xf]
      %v478 = vld [vmem:[%s1 + $0x30] sm:$0xf]
      %v479 = vld [vmem:[%s1 + $0x34] sm:$0xf]
      %v480 = vld [vmem:[%s1 + $0x38] sm:$0xf]
      %v481 = vld [vmem:[%s1 + $0x3c] sm:$0xf]
      %v482 = vld [vmem:[%s1 + $0x40] sm:$0xf]
      %v483 = vld [vmem:[%s1 + $0x44] sm:$0xf]
      %v484 = vld [vmem:[%s1 + $0x48] sm:$0x1]
      %v485 = vld [vmem:[%s2] sm:$0x1]
      %v487 = vperm.slane %v485, 0
      %v505 = vunpack.c.l.b16 %v450
      %v506 = vunpack.c.h.b16 %v450
      %v507 = vunpack.c.l.b16 %v451
      %v508 = vunpack.c.h.b16 %v451
      %v509 = vunpack.c.l.b16 %v452
      %v510 = vunpack.c.h.b16 %v452
      %v511 = vunpack.c.l.b16 %v453
      %v512 = vunpack.c.h.b16 %v453
      %v513 = vunpack.c.l.b16 %v454
      %v514 = vunpack.c.h.b16 %v454
      %v515 = vunpack.c.l.b16 %v455
      %v516 = vunpack.c.h.b16 %v455
      %v517 = vunpack.c.l.b16 %v456
      %v518 = vunpack.c.h.b16 %v456
      %v519 = vunpack.c.l.b16 %v457
      %v520 = vunpack.c.h.b16 %v457
      %v521 = vunpack.c.l.b16 %v458
      %v522 = vunpack.c.h.b16 %v458
      %v523 = vunpack.c.l.b16 %v459
      %v524 = vunpack.c.h.b16 %v459
      %v525 = vunpack.c.l.b16 %v460
      %v526 = vunpack.c.h.b16 %v460
      %v527 = vunpack.c.l.b16 %v461
      %v528 = vunpack.c.h.b16 %v461
      %v529 = vunpack.c.l.b16 %v462
      %v530 = vunpack.c.h.b16 %v462
      %v531 = vunpack.c.l.b16 %v463
      %v532 = vunpack.c.h.b16 %v463
      %v533 = vunpack.c.l.b16 %v464
      %v534 = vunpack.c.h.b16 %v464
      %v535 = vunpack.c.l.b16 %v465
      %v536 = vunpack.c.h.b16 %v465
      %v537 = vpack.c.b16 %v507, %v505
      %v538 = vpack.c.b16 %v508, %v506
      %v539 = vpack.c.b16 %v511, %v509
      %v540 = vpack.c.b16 %v512, %v510
      %v541 = vpack.c.b16 %v515, %v513
      %v542 = vpack.c.b16 %v516, %v514
      %v543 = vpack.c.b16 %v519, %v517
      %v544 = vpack.c.b16 %v520, %v518
      %v545 = vpack.c.b16 %v523, %v521
      %v546 = vpack.c.b16 %v524, %v522
      %v547 = vpack.c.b16 %v527, %v525
      %v548 = vpack.c.b16 %v528, %v526
      %v549 = vpack.c.b16 %v531, %v529
      %v550 = vpack.c.b16 %v532, %v530
      %v551 = vpack.c.b16 %v535, %v533
      %v552 = vpack.c.b16 %v536, %v534
      %v580 = vunpack.c.l.b16 %v466
      %v581 = vunpack.c.l.b16 %v467
      %v582 = vunpack.c.l.b16 %v468
      %v583 = vunpack.c.l.b16 %v469
      %v584 = vunpack.c.l.b16 %v470
      %v585 = vunpack.c.l.b16 %v471
      %v586 = vunpack.c.l.b16 %v472
      %v587 = vunpack.c.l.b16 %v473
      %v588 = vunpack.c.l.b16 %v474
      %v589 = vunpack.c.l.b16 %v475
      %v590 = vunpack.c.l.b16 %v476
      %v591 = vunpack.c.l.b16 %v477
      %v592 = vunpack.c.l.b16 %v478
      %v593 = vunpack.c.l.b16 %v479
      %v594 = vunpack.c.l.b16 %v480
      %v595 = vunpack.c.l.b16 %v481
      %v596 = vunpack.c.l.b16 %v482
      %v597 = vunpack.c.l.b16 %v483
      %v598 = vunpack.c.l.b16 %v484
      %v599 = vpack.c.b16 %v581, %v580
      %v600 = vpack.c.b16 %v583, %v582
      %v601 = vpack.c.b16 %v585, %v584
      %v602 = vpack.c.b16 %v587, %v586
      %v603 = vpack.c.b16 %v589, %v588
      %v604 = vpack.c.b16 %v591, %v590
      %v605 = vpack.c.b16 %v593, %v592
      %v606 = vpack.c.b16 %v595, %v594
      %v607 = vpack.c.b16 %v597, %v596
      %v608 = vpack.c.b16 %v598, %v598
      %vm618 = vcmask 146432
      %v620 = vsel %vm618, %v538, 0
      %v623 = vsel %vm618, %v540, 0
      %v626 = vsel %vm618, %v542, 0
      %v629 = vsel %vm618, %v544, 0
      %v632 = vsel %vm618, %v546, 0
      %v635 = vsel %vm618, %v548, 0
      %v638 = vsel %vm618, %v550, 0
      %v641 = vsel %vm618, %v552, 0
      %vm643 = vcmask 1040384
      %v645 = vsel %vm643, %v608, 0
      %647 = vmatpush.bf16.msra.mxu0 %v606
      %648 = vmatpush.bf16.msra.mxu0 %v605
      %649 = vmatpush.bf16.msra.mxu0 %v604
      %650 = vmatpush.bf16.msra.mxu0 %v603
      %651 = vmatpush.bf16.msra.mxu0 %v602
      %652 = vmatpush.bf16.msra.mxu0 %v601
      %653 = vmatpush.bf16.msra.mxu0 %v600
      %654 = vmatpush.bf16.msra.mxu0 %v599
      %655 = vmatmul.bf16.gmra.mxu0 %v537
      %v656 = vpop.f32.mrf.mxu0
      %v657 = vadd.f32 %v487, %v656
      %v658 = vpop.f32.mrf.mxu0
      %v659 = vadd.f32 %v487, %v658
      %660 = vmatmul.bf16.gmra.mxu0 %v539
      %v661 = vpop.f32.mrf.mxu0
      %v662 = vadd.f32 %v487, %v661
      %v663 = vpop.f32.mrf.mxu0
      %v664 = vadd.f32 %v487, %v663
      %665 = vmatmul.bf16.gmra.mxu0 %v541
      %v666 = vpop.f32.mrf.mxu0
      %v667 = vadd.f32 %v487, %v666
      %v668 = vpop.f32.mrf.mxu0
      %v669 = vadd.f32 %v487, %v668
      %670 = vmatmul.bf16.gmra.mxu0 %v543
      %v671 = vpop.f32.mrf.mxu0
      %v672 = vadd.f32 %v487, %v671
      %v673 = vpop.f32.mrf.mxu0
      %v674 = vadd.f32 %v487, %v673
      %675 = vmatmul.bf16.gmra.mxu0 %v545
      %v676 = vpop.f32.mrf.mxu0
      %v677 = vadd.f32 %v487, %v676
      %v678 = vpop.f32.mrf.mxu0
      %v679 = vadd.f32 %v487, %v678
      %680 = vmatmul.bf16.gmra.mxu0 %v547
      %v681 = vpop.f32.mrf.mxu0
      %v682 = vadd.f32 %v487, %v681
      %v683 = vpop.f32.mrf.mxu0
      %v684 = vadd.f32 %v487, %v683
      %685 = vmatmul.bf16.gmra.mxu0 %v549
      %v686 = vpop.f32.mrf.mxu0
      %v687 = vadd.f32 %v487, %v686
      %v688 = vpop.f32.mrf.mxu0
      %v689 = vadd.f32 %v487, %v688
      %690 = vmatmul.bf16.gmra.mxu0 %v551
      %v691 = vpop.f32.mrf.mxu0
      %v692 = vadd.f32 %v487, %v691
      %v693 = vpop.f32.mrf.mxu0
      %v694 = vadd.f32 %v487, %v693
      %695 = vdwg.mxu0
      %696 = vmatpush.bf16.msra.mxu0 0
      %697 = vmatpush.bf16.msra.mxu0 0
      %698 = vmatpush.bf16.msra.mxu0 0
      %699 = vmatpush.bf16.msra.mxu0 0
      %700 = vmatpush.bf16.msra.mxu0 0
      %701 = vmatpush.bf16.msra.mxu0 0
      %702 = vmatpush.bf16.msra.mxu0 %v645
      %703 = vmatpush.bf16.msra.mxu0 %v607
      %704 = vmatmul.bf16.gmra.mxu0 %v620
      %v705 = vpop.f32.mrf.mxu0
      %v706 = vadd.f32 %v657, %v705
      %v707 = vpop.f32.mrf.mxu0
      %v708 = vadd.f32 %v659, %v707
      %709 = vmatmul.bf16.gmra.mxu0 %v623
      %v710 = vpop.f32.mrf.mxu0
      %v711 = vadd.f32 %v662, %v710
      %v712 = vpop.f32.mrf.mxu0
      %v713 = vadd.f32 %v664, %v712
      %714 = vmatmul.bf16.gmra.mxu0 %v626
      %v715 = vpop.f32.mrf.mxu0
      %v716 = vadd.f32 %v667, %v715
      %v717 = vpop.f32.mrf.mxu0
      %v718 = vadd.f32 %v669, %v717
      %719 = vmatmul.bf16.gmra.mxu0 %v629
      %v720 = vpop.f32.mrf.mxu0
      %v721 = vadd.f32 %v672, %v720
      %v722 = vpop.f32.mrf.mxu0
      %v723 = vadd.f32 %v674, %v722
      %724 = vmatmul.bf16.gmra.mxu0 %v632
      %v725 = vpop.f32.mrf.mxu0
      %v726 = vadd.f32 %v677, %v725
      %v727 = vpop.f32.mrf.mxu0
      %v728 = vadd.f32 %v679, %v727
      %729 = vmatmul.bf16.gmra.mxu0 %v635
      %v730 = vpop.f32.mrf.mxu0
      %v731 = vadd.f32 %v682, %v730
      %v732 = vpop.f32.mrf.mxu0
      %v733 = vadd.f32 %v684, %v732
      %734 = vmatmul.bf16.gmra.mxu0 %v638
      %v735 = vpop.f32.mrf.mxu0
      %v736 = vadd.f32 %v687, %v735
      %v737 = vpop.f32.mrf.mxu0
      %v738 = vadd.f32 %v689, %v737
      %739 = vmatmul.bf16.gmra.mxu0 %v641
      %v740 = vpop.f32.mrf.mxu0
      %v741 = vadd.f32 %v692, %v740
      %v742 = vpop.f32.mrf.mxu0
      %v743 = vadd.f32 %v694, %v742
      %744 = vdwg.mxu0
      %vm745 = vcmp.gt.f32.partialorder %v706, 0.0
      %vm746 = vcmp.gt.f32.partialorder %v708, 0.0
      %vm747 = vcmp.gt.f32.partialorder %v711, 0.0
      %vm748 = vcmp.gt.f32.partialorder %v713, 0.0
      %vm749 = vcmp.gt.f32.partialorder %v716, 0.0
      %vm750 = vcmp.gt.f32.partialorder %v718, 0.0
      %vm751 = vcmp.gt.f32.partialorder %v721, 0.0
      %vm752 = vcmp.gt.f32.partialorder %v723, 0.0
      %vm753 = vcmp.gt.f32.partialorder %v726, 0.0
      %vm754 = vcmp.gt.f32.partialorder %v728, 0.0
      %vm755 = vcmp.gt.f32.partialorder %v731, 0.0
      %vm756 = vcmp.gt.f32.partialorder %v733, 0.0
      %vm757 = vcmp.gt.f32.partialorder %v736, 0.0
      %vm758 = vcmp.gt.f32.partialorder %v738, 0.0
      %vm759 = vcmp.gt.f32.partialorder %v741, 0.0
      %vm760 = vcmp.gt.f32.partialorder %v743, 0.0
      %v761 = vmul.f32 %v706, 0.01
      %v762 = vmul.f32 %v708, 0.01
      %v763 = vmul.f32 %v711, 0.01
      %v764 = vmul.f32 %v713, 0.01
      %v765 = vmul.f32 %v716, 0.01
      %v766 = vmul.f32 %v718, 0.01
      %v767 = vmul.f32 %v721, 0.01
      %v768 = vmul.f32 %v723, 0.01
      %v769 = vmul.f32 %v726, 0.01
      %v770 = vmul.f32 %v728, 0.01
      %v771 = vmul.f32 %v731, 0.01
      %v772 = vmul.f32 %v733, 0.01
      %v773 = vmul.f32 %v736, 0.01
      %v774 = vmul.f32 %v738, 0.01
      %v775 = vmul.f32 %v741, 0.01
      %v776 = vmul.f32 %v743, 0.01
      %v777 = vsel %vm745, %v706, %v761
      %v778 = vsel %vm746, %v708, %v762
      %v779 = vsel %vm747, %v711, %v763
      %v780 = vsel %vm748, %v713, %v764
      %v781 = vsel %vm749, %v716, %v765
      %v782 = vsel %vm750, %v718, %v766
      %v783 = vsel %vm751, %v721, %v767
      %v784 = vsel %vm752, %v723, %v768
      %v785 = vsel %vm753, %v726, %v769
      %v786 = vsel %vm754, %v728, %v770
      %v787 = vsel %vm755, %v731, %v771
      %v788 = vsel %vm756, %v733, %v772
      %v789 = vsel %vm757, %v736, %v773
      %v790 = vsel %vm758, %v738, %v774
      %v791 = vsel %vm759, %v741, %v775
      %v792 = vsel %vm760, %v743, %v776
      %v793 = vld [vmem:[%s3] sm:$0xf]
      %v794 = vld [vmem:[%s3 + $0x4] sm:$0xf]
      %v795 = vld [vmem:[%s3 + $0x8] sm:$0xf]
      %v796 = vld [vmem:[%s3 + $0xc] sm:$0xf]
      %v797 = vld [vmem:[%s3 + $0x10] sm:$0xf]
      %v798 = vld [vmem:[%s3 + $0x14] sm:$0xf]
      %v799 = vld [vmem:[%s3 + $0x18] sm:$0x1]
      %v800 = vld [vmem:[%s4] sm:$0x1]
      %v801 = vpack.c.bf16 %v778, %v777
      %v802 = vpack.c.bf16 %v780, %v779
      %v803 = vpack.c.bf16 %v782, %v781
      %v804 = vpack.c.bf16 %v784, %v783
      %v805 = vpack.c.bf16 %v786, %v785
      %v806 = vpack.c.bf16 %v788, %v787
      %v807 = vpack.c.bf16 %v790, %v789
      %v808 = vpack.c.bf16 %v792, %v791
      %v810 = vperm.slane %v800, 0
      %v819 = vunpack.c.l.b16 %v793
      %v820 = vunpack.c.l.b16 %v794
      %v821 = vunpack.c.l.b16 %v795
      %v822 = vunpack.c.l.b16 %v796
      %v823 = vunpack.c.l.b16 %v797
      %v824 = vunpack.c.l.b16 %v798
      %v825 = vunpack.c.l.b16 %v799
      %v826 = vpack.c.b16 %v820, %v819
      %v827 = vpack.c.b16 %v822, %v821
      %v828 = vpack.c.b16 %v824, %v823
      %v829 = vpack.c.b16 %v825, %v825
      %vm833 = vcmask 408576
      %v835 = vsel %vm833, %v801, 0
      %v838 = vsel %vm833, %v802, 0
      %v841 = vsel %vm833, %v803, 0
      %v844 = vsel %vm833, %v804, 0
      %v847 = vsel %vm833, %v805, 0
      %v850 = vsel %vm833, %v806, 0
      %v853 = vsel %vm833, %v807, 0
      %v856 = vsel %vm833, %v808, 0
      %v859 = vsel %vm643, %v829, 0
      %861 = vmatpush.bf16.msra.mxu0 0
      %862 = vmatpush.bf16.msra.mxu0 0
      %863 = vmatpush.bf16.msra.mxu0 0
      %864 = vmatpush.bf16.msra.mxu0 0
      %865 = vmatpush.bf16.msra.mxu0 %v859
      %866 = vmatpush.bf16.msra.mxu0 %v828
      %867 = vmatpush.bf16.msra.mxu0 %v827
      %868 = vmatpush.bf16.msra.mxu0 %v826
      %869 = vmatmul.bf16.gmra.mxu0 %v835
      %v870 = vpop.f32.mrf.mxu0
      %v871 = vadd.f32 %v810, %v870
      %v872 = vpop.f32.mrf.mxu0
      %v873 = vadd.f32 %v810, %v872
      %874 = vmatmul.bf16.gmra.mxu0 %v838
      %v875 = vpop.f32.mrf.mxu0
      %v876 = vadd.f32 %v810, %v875
      %v877 = vpop.f32.mrf.mxu0
      %v878 = vadd.f32 %v810, %v877
      %879 = vmatmul.bf16.gmra.mxu0 %v841
      %v880 = vpop.f32.mrf.mxu0
      %v881 = vadd.f32 %v810, %v880
      %v882 = vpop.f32.mrf.mxu0
      %v883 = vadd.f32 %v810, %v882
      %884 = vmatmul.bf16.gmra.mxu0 %v844
      %v885 = vpop.f32.mrf.mxu0
      %v886 = vadd.f32 %v810, %v885
      %v887 = vpop.f32.mrf.mxu0
      %v888 = vadd.f32 %v810, %v887
      %889 = vmatmul.bf16.gmra.mxu0 %v847
      %v890 = vpop.f32.mrf.mxu0
      %v891 = vadd.f32 %v810, %v890
      %v892 = vpop.f32.mrf.mxu0
      %v893 = vadd.f32 %v810, %v892
      %894 = vmatmul.bf16.gmra.mxu0 %v850
      %v895 = vpop.f32.mrf.mxu0
      %v896 = vadd.f32 %v810, %v895
      %v897 = vpop.f32.mrf.mxu0
      %v898 = vadd.f32 %v810, %v897
      %899 = vmatmul.bf16.gmra.mxu0 %v853
      %v900 = vpop.f32.mrf.mxu0
      %v901 = vadd.f32 %v810, %v900
      %v902 = vpop.f32.mrf.mxu0
      %v903 = vadd.f32 %v810, %v902
      %904 = vmatmul.bf16.gmra.mxu0 %v856
      %v905 = vpop.f32.mrf.mxu0
      %v906 = vadd.f32 %v810, %v905
      %v907 = vpop.f32.mrf.mxu0
      %v908 = vadd.f32 %v810, %v907
      %909 = vdwg.mxu0
      %vm910 = vcmp.gt.f32.partialorder %v871, 0.0
      %vm911 = vcmp.gt.f32.partialorder %v873, 0.0
      %vm912 = vcmp.gt.f32.partialorder %v876, 0.0
      %vm913 = vcmp.gt.f32.partialorder %v878, 0.0
      %vm914 = vcmp.gt.f32.partialorder %v881, 0.0
      %vm915 = vcmp.gt.f32.partialorder %v883, 0.0
      %vm916 = vcmp.gt.f32.partialorder %v886, 0.0
      %vm917 = vcmp.gt.f32.partialorder %v888, 0.0
      %vm918 = vcmp.gt.f32.partialorder %v891, 0.0
      %vm919 = vcmp.gt.f32.partialorder %v893, 0.0
      %vm920 = vcmp.gt.f32.partialorder %v896, 0.0
      %vm921 = vcmp.gt.f32.partialorder %v898, 0.0
      %vm922 = vcmp.gt.f32.partialorder %v901, 0.0
      %vm923 = vcmp.gt.f32.partialorder %v903, 0.0
      %vm924 = vcmp.gt.f32.partialorder %v906, 0.0
      %vm925 = vcmp.gt.f32.partialorder %v908, 0.0
      %v926 = vmul.f32 %v871, 0.01
      %v927 = vmul.f32 %v873, 0.01
      %v928 = vmul.f32 %v876, 0.01
      %v929 = vmul.f32 %v878, 0.01
      %v930 = vmul.f32 %v881, 0.01
      %v931 = vmul.f32 %v883, 0.01
      %v932 = vmul.f32 %v886, 0.01
      %v933 = vmul.f32 %v888, 0.01
      %v934 = vmul.f32 %v891, 0.01
      %v935 = vmul.f32 %v893, 0.01
      %v936 = vmul.f32 %v896, 0.01
      %v937 = vmul.f32 %v898, 0.01
      %v938 = vmul.f32 %v901, 0.01
      %v939 = vmul.f32 %v903, 0.01
      %v940 = vmul.f32 %v906, 0.01
      %v941 = vmul.f32 %v908, 0.01
      %v942 = vsel %vm910, %v871, %v926
      %v943 = vsel %vm911, %v873, %v927
      %v944 = vsel %vm912, %v876, %v928
      %v945 = vsel %vm913, %v878, %v929
      %v946 = vsel %vm914, %v881, %v930
      %v947 = vsel %vm915, %v883, %v931
      %v948 = vsel %vm916, %v886, %v932
      %v949 = vsel %vm917, %v888, %v933
      %v950 = vsel %vm918, %v891, %v934
      %v951 = vsel %vm919, %v893, %v935
      %v952 = vsel %vm920, %v896, %v936
      %v953 = vsel %vm921, %v898, %v937
      %v954 = vsel %vm922, %v901, %v938
      %v955 = vsel %vm923, %v903, %v939
      %v956 = vsel %vm924, %v906, %v940
      %v957 = vsel %vm925, %v908, %v941
      %v958 = vld [vmem:[%s5] sm:$0xf]
      %v959 = vld [vmem:[%s5 + $0x4] sm:$0xf]
      %v960 = vld [vmem:[%s5 + $0x8] sm:$0x3]
      %v961 = vld [vmem:[%s6] sm:$0x1]
      %v962 = vpack.c.bf16 %v943, %v942
      %v963 = vpack.c.bf16 %v945, %v944
      %v964 = vpack.c.bf16 %v947, %v946
      %v965 = vpack.c.bf16 %v949, %v948
      %v966 = vpack.c.bf16 %v951, %v950
      %v967 = vpack.c.bf16 %v953, %v952
      %v968 = vpack.c.bf16 %v955, %v954
      %v969 = vpack.c.bf16 %v957, %v956
      %v971 = vperm.slane %v961, 0
      %v976 = vunpack.c.l.b16 %v958
      %v977 = vunpack.c.l.b16 %v959
      %v978 = vunpack.c.l.b16 %v960
      %v979 = vpack.c.b16 %v977, %v976
      %v980 = vpack.c.b16 %v978, %v978
      %vm982 = vcmask 162816
      %v984 = vsel %vm982, %v962, 0
      %v987 = vsel %vm982, %v963, 0
      %v990 = vsel %vm982, %v964, 0
      %v993 = vsel %vm982, %v965, 0
      %v996 = vsel %vm982, %v966, 0
      %v999 = vsel %vm982, %v967, 0
      %v1002 = vsel %vm982, %v968, 0
      %v1005 = vsel %vm982, %v969, 0
      %vm1007 = vcmask 1041408
      %v1009 = vsel %vm1007, %v980, 0
      %1011 = vmatpush.bf16.msra.mxu0 0
      %1012 = vmatpush.bf16.msra.mxu0 0
      %1013 = vmatpush.bf16.msra.mxu0 0
      %1014 = vmatpush.bf16.msra.mxu0 0
      %1015 = vmatpush.bf16.msra.mxu0 0
      %1016 = vmatpush.bf16.msra.mxu0 0
      %1017 = vmatpush.bf16.msra.mxu0 %v1009
      %1018 = vmatpush.bf16.msra.mxu0 %v979
      %1019 = vmatmul.bf16.gmra.mxu0 %v984
      %v1020 = vpop.f32.mrf.mxu0
      %v1021 = vadd.f32 %v971, %v1020
      %v1022 = vpop.f32.mrf.mxu0
      %v1023 = vadd.f32 %v971, %v1022
      %1024 = vmatmul.bf16.gmra.mxu0 %v987
      %v1025 = vpop.f32.mrf.mxu0
      %v1026 = vadd.f32 %v971, %v1025
      %v1027 = vpop.f32.mrf.mxu0
      %v1028 = vadd.f32 %v971, %v1027
      %1029 = vmatmul.bf16.gmra.mxu0 %v990
      %v1030 = vpop.f32.mrf.mxu0
      %v1031 = vadd.f32 %v971, %v1030
      %v1032 = vpop.f32.mrf.mxu0
      %v1033 = vadd.f32 %v971, %v1032
      %1034 = vmatmul.bf16.gmra.mxu0 %v993
      %v1035 = vpop.f32.mrf.mxu0
      %v1036 = vadd.f32 %v971, %v1035
      %v1037 = vpop.f32.mrf.mxu0
      %v1038 = vadd.f32 %v971, %v1037
      %1039 = vmatmul.bf16.gmra.mxu0 %v996
      %v1040 = vpop.f32.mrf.mxu0
      %v1041 = vadd.f32 %v971, %v1040
      %v1042 = vpop.f32.mrf.mxu0
      %v1043 = vadd.f32 %v971, %v1042
      %1044 = vmatmul.bf16.gmra.mxu0 %v999
      %v1045 = vpop.f32.mrf.mxu0
      %v1046 = vadd.f32 %v971, %v1045
      %v1047 = vpop.f32.mrf.mxu0
      %v1048 = vadd.f32 %v971, %v1047
      %1049 = vmatmul.bf16.gmra.mxu0 %v1002
      %v1050 = vpop.f32.mrf.mxu0
      %v1051 = vadd.f32 %v971, %v1050
      %v1052 = vpop.f32.mrf.mxu0
      %v1053 = vadd.f32 %v971, %v1052
      %1054 = vmatmul.bf16.gmra.mxu0 %v1005
      %v1055 = vpop.f32.mrf.mxu0
      %v1056 = vadd.f32 %v971, %v1055
      %v1057 = vpop.f32.mrf.mxu0
      %v1058 = vadd.f32 %v971, %v1057
      %1059 = vdwg.mxu0
      %vm1060 = vcmp.gt.f32.partialorder %v1021, 0.0
      %vm1061 = vcmp.gt.f32.partialorder %v1023, 0.0
      %vm1062 = vcmp.gt.f32.partialorder %v1026, 0.0
      %vm1063 = vcmp.gt.f32.partialorder %v1028, 0.0
      %vm1064 = vcmp.gt.f32.partialorder %v1031, 0.0
      %vm1065 = vcmp.gt.f32.partialorder %v1033, 0.0
      %vm1066 = vcmp.gt.f32.partialorder %v1036, 0.0
      %vm1067 = vcmp.gt.f32.partialorder %v1038, 0.0
      %vm1068 = vcmp.gt.f32.partialorder %v1041, 0.0
      %vm1069 = vcmp.gt.f32.partialorder %v1043, 0.0
      %vm1070 = vcmp.gt.f32.partialorder %v1046, 0.0
      %vm1071 = vcmp.gt.f32.partialorder %v1048, 0.0
      %vm1072 = vcmp.gt.f32.partialorder %v1051, 0.0
      %vm1073 = vcmp.gt.f32.partialorder %v1053, 0.0
      %vm1074 = vcmp.gt.f32.partialorder %v1056, 0.0
      %vm1075 = vcmp.gt.f32.partialorder %v1058, 0.0
      %v1076 = vmul.f32 %v1021, 0.01
      %v1077 = vmul.f32 %v1023, 0.01
      %v1078 = vmul.f32 %v1026, 0.01
      %v1079 = vmul.f32 %v1028, 0.01
      %v1080 = vmul.f32 %v1031, 0.01
      %v1081 = vmul.f32 %v1033, 0.01
      %v1082 = vmul.f32 %v1036, 0.01
      %v1083 = vmul.f32 %v1038, 0.01
      %v1084 = vmul.f32 %v1041, 0.01
      %v1085 = vmul.f32 %v1043, 0.01
      %v1086 = vmul.f32 %v1046, 0.01
      %v1087 = vmul.f32 %v1048, 0.01
      %v1088 = vmul.f32 %v1051, 0.01
      %v1089 = vmul.f32 %v1053, 0.01
      %v1090 = vmul.f32 %v1056, 0.01
      %v1091 = vmul.f32 %v1058, 0.01
      %v1092 = vsel %vm1060, %v1021, %v1076
      %v1093 = vsel %vm1061, %v1023, %v1077
      %v1094 = vsel %vm1062, %v1026, %v1078
      %v1095 = vsel %vm1063, %v1028, %v1079
      %v1096 = vsel %vm1064, %v1031, %v1080
      %v1097 = vsel %vm1065, %v1033, %v1081
      %v1098 = vsel %vm1066, %v1036, %v1082
      %v1099 = vsel %vm1067, %v1038, %v1083
      %v1100 = vsel %vm1068, %v1041, %v1084
      %v1101 = vsel %vm1069, %v1043, %v1085
      %v1102 = vsel %vm1070, %v1046, %v1086
      %v1103 = vsel %vm1071, %v1048, %v1087
      %v1104 = vsel %vm1072, %v1051, %v1088
      %v1105 = vsel %vm1073, %v1053, %v1089
      %v1106 = vsel %vm1074, %v1056, %v1090
      %v1107 = vsel %vm1075, %v1058, %v1091
      %v1108 = vld [vmem:[%s7] sm:$0xf]
      %v1109 = vld [vmem:[%s7 + $0x4] sm:$0xf]
      %v1110 = vld [vmem:[%s7 + $0x8] sm:$0x3]
      %v1111 = vld [vmem:[%s8] sm:$0x1]
      %v1112 = vpack.c.bf16 %v1093, %v1092
      %v1113 = vpack.c.bf16 %v1095, %v1094
      %v1114 = vpack.c.bf16 %v1097, %v1096
      %v1115 = vpack.c.bf16 %v1099, %v1098
      %v1116 = vpack.c.bf16 %v1101, %v1100
      %v1117 = vpack.c.bf16 %v1103, %v1102
      %v1118 = vpack.c.bf16 %v1105, %v1104
      %v1119 = vpack.c.bf16 %v1107, %v1106
      %v1121 = vperm.slane %v1111, 0
      %v1126 = vunpack.c.l.b16 %v1108
      %v1127 = vunpack.c.l.b16 %v1109
      %v1128 = vunpack.c.l.b16 %v1110
      %v1129 = vpack.c.b16 %v1127, %v1126
      %v1130 = vpack.c.b16 %v1128, %v1128
      %v1133 = vsel %vm982, %v1112, 0
      %v1136 = vsel %vm982, %v1113, 0
      %v1139 = vsel %vm982, %v1114, 0
      %v1142 = vsel %vm982, %v1115, 0
      %v1145 = vsel %vm982, %v1116, 0
      %v1148 = vsel %vm982, %v1117, 0
      %v1151 = vsel %vm982, %v1118, 0
      %v1154 = vsel %vm982, %v1119, 0
      %v1157 = vsel %vm1007, %v1130, 0
      %1159 = vmatpush.bf16.msra.mxu0 0
      %1160 = vmatpush.bf16.msra.mxu0 0
      %1161 = vmatpush.bf16.msra.mxu0 0
      %1162 = vmatpush.bf16.msra.mxu0 0
      %1163 = vmatpush.bf16.msra.mxu0 0
      %1164 = vmatpush.bf16.msra.mxu0 0
      %1165 = vmatpush.bf16.msra.mxu0 %v1157
      %1166 = vmatpush.bf16.msra.mxu0 %v1129
      %1167 = vmatmul.bf16.gmra.mxu0 %v1133
      %v1168 = vpop.f32.mrf.mxu0
      %v1169 = vadd.f32 %v1121, %v1168
      %v1170 = vpop.f32.mrf.mxu0
      %v1171 = vadd.f32 %v1121, %v1170
      %1172 = vmatmul.bf16.gmra.mxu0 %v1136
      %v1173 = vpop.f32.mrf.mxu0
      %v1174 = vadd.f32 %v1121, %v1173
      %v1175 = vpop.f32.mrf.mxu0
      %v1176 = vadd.f32 %v1121, %v1175
      %1177 = vmatmul.bf16.gmra.mxu0 %v1139
      %v1178 = vpop.f32.mrf.mxu0
      %v1179 = vadd.f32 %v1121, %v1178
      %v1180 = vpop.f32.mrf.mxu0
      %v1181 = vadd.f32 %v1121, %v1180
      %1182 = vmatmul.bf16.gmra.mxu0 %v1142
      %v1183 = vpop.f32.mrf.mxu0
      %v1184 = vadd.f32 %v1121, %v1183
      %v1185 = vpop.f32.mrf.mxu0
      %v1186 = vadd.f32 %v1121, %v1185
      %1187 = vmatmul.bf16.gmra.mxu0 %v1145
      %v1188 = vpop.f32.mrf.mxu0
      %v1189 = vadd.f32 %v1121, %v1188
      %v1190 = vpop.f32.mrf.mxu0
      %v1191 = vadd.f32 %v1121, %v1190
      %1192 = vmatmul.bf16.gmra.mxu0 %v1148
      %v1193 = vpop.f32.mrf.mxu0
      %v1194 = vadd.f32 %v1121, %v1193
      %v1195 = vpop.f32.mrf.mxu0
      %v1196 = vadd.f32 %v1121, %v1195
      %1197 = vmatmul.bf16.gmra.mxu0 %v1151
      %v1198 = vpop.f32.mrf.mxu0
      %v1199 = vadd.f32 %v1121, %v1198
      %v1200 = vpop.f32.mrf.mxu0
      %v1201 = vadd.f32 %v1121, %v1200
      %1202 = vmatmul.bf16.gmra.mxu0 %v1154
      %v1203 = vpop.f32.mrf.mxu0
      %v1204 = vadd.f32 %v1121, %v1203
      %v1205 = vpop.f32.mrf.mxu0
      %v1206 = vadd.f32 %v1121, %v1205
      %1207 = vdwg.mxu0
      %vm1208 = vcmp.gt.f32.partialorder %v1169, 0.0
      %vm1209 = vcmp.gt.f32.partialorder %v1171, 0.0
      %vm1210 = vcmp.gt.f32.partialorder %v1174, 0.0
      %vm1211 = vcmp.gt.f32.partialorder %v1176, 0.0
      %vm1212 = vcmp.gt.f32.partialorder %v1179, 0.0
      %vm1213 = vcmp.gt.f32.partialorder %v1181, 0.0
      %vm1214 = vcmp.gt.f32.partialorder %v1184, 0.0
      %vm1215 = vcmp.gt.f32.partialorder %v1186, 0.0
      %vm1216 = vcmp.gt.f32.partialorder %v1189, 0.0
      %vm1217 = vcmp.gt.f32.partialorder %v1191, 0.0
      %vm1218 = vcmp.gt.f32.partialorder %v1194, 0.0
      %vm1219 = vcmp.gt.f32.partialorder %v1196, 0.0
      %vm1220 = vcmp.gt.f32.partialorder %v1199, 0.0
      %vm1221 = vcmp.gt.f32.partialorder %v1201, 0.0
      %vm1222 = vcmp.gt.f32.partialorder %v1204, 0.0
      %vm1223 = vcmp.gt.f32.partialorder %v1206, 0.0
      %v1224 = vmul.f32 %v1169, 0.01
      %v1225 = vmul.f32 %v1171, 0.01
      %v1226 = vmul.f32 %v1174, 0.01
      %v1227 = vmul.f32 %v1176, 0.01
      %v1228 = vmul.f32 %v1179, 0.01
      %v1229 = vmul.f32 %v1181, 0.01
      %v1230 = vmul.f32 %v1184, 0.01
      %v1231 = vmul.f32 %v1186, 0.01
      %v1232 = vmul.f32 %v1189, 0.01
      %v1233 = vmul.f32 %v1191, 0.01
      %v1234 = vmul.f32 %v1194, 0.01
      %v1235 = vmul.f32 %v1196, 0.01
      %v1236 = vmul.f32 %v1199, 0.01
      %v1237 = vmul.f32 %v1201, 0.01
      %v1238 = vmul.f32 %v1204, 0.01
      %v1239 = vmul.f32 %v1206, 0.01
      %v1240 = vsel %vm1208, %v1169, %v1224
      %v1241 = vsel %vm1209, %v1171, %v1225
      %v1242 = vsel %vm1210, %v1174, %v1226
      %v1243 = vsel %vm1211, %v1176, %v1227
      %v1244 = vsel %vm1212, %v1179, %v1228
      %v1245 = vsel %vm1213, %v1181, %v1229
      %v1246 = vsel %vm1214, %v1184, %v1230
      %v1247 = vsel %vm1215, %v1186, %v1231
      %v1248 = vsel %vm1216, %v1189, %v1232
      %v1249 = vsel %vm1217, %v1191, %v1233
      %v1250 = vsel %vm1218, %v1194, %v1234
      %v1251 = vsel %vm1219, %v1196, %v1235
      %v1252 = vsel %vm1220, %v1199, %v1236
      %v1253 = vsel %vm1221, %v1201, %v1237
      %v1254 = vsel %vm1222, %v1204, %v1238
      %v1255 = vsel %vm1223, %v1206, %v1239
      %v1256 = vld [vmem:[%s9] sm:$0xf]
      %v1257 = vld [vmem:[%s9 + $0x4] sm:$0xf]
      %v1258 = vld [vmem:[%s9 + $0x8] sm:$0x3]
      %v1259 = vld [vmem:[%s10] sm:$0x1]
      %v1260 = vpack.c.bf16 %v1241, %v1240
      %v1261 = vpack.c.bf16 %v1243, %v1242
      %v1262 = vpack.c.bf16 %v1245, %v1244
      %v1263 = vpack.c.bf16 %v1247, %v1246
      %v1264 = vpack.c.bf16 %v1249, %v1248
      %v1265 = vpack.c.bf16 %v1251, %v1250
      %v1266 = vpack.c.bf16 %v1253, %v1252
      %v1267 = vpack.c.bf16 %v1255, %v1254
      %v1269 = vperm.slane %v1259, 0
      %v1274 = vunpack.c.l.b16 %v1256
      %v1275 = vunpack.c.l.b16 %v1257
      %v1276 = vunpack.c.l.b16 %v1258
      %v1277 = vpack.c.b16 %v1275, %v1274
      %v1278 = vpack.c.b16 %v1276, %v1276
      %v1281 = vsel %vm982, %v1260, 0
      %v1284 = vsel %vm982, %v1261, 0
      %v1287 = vsel %vm982, %v1262, 0
      %v1290 = vsel %vm982, %v1263, 0
      %v1293 = vsel %vm982, %v1264, 0
      %v1296 = vsel %vm982, %v1265, 0
      %v1299 = vsel %vm982, %v1266, 0
      %v1302 = vsel %vm982, %v1267, 0
      %v1305 = vsel %vm1007, %v1278, 0
      %1307 = vmatpush.bf16.msra.mxu0 0
      %1308 = vmatpush.bf16.msra.mxu0 0
      %1309 = vmatpush.bf16.msra.mxu0 0
      %1310 = vmatpush.bf16.msra.mxu0 0
      %1311 = vmatpush.bf16.msra.mxu0 0
      %1312 = vmatpush.bf16.msra.mxu0 0
      %1313 = vmatpush.bf16.msra.mxu0 %v1305
      %1314 = vmatpush.bf16.msra.mxu0 %v1277
      %1315 = vmatmul.bf16.gmra.mxu0 %v1281
      %v1316 = vpop.f32.mrf.mxu0
      %v1317 = vadd.f32 %v1269, %v1316
      %v1318 = vpop.f32.mrf.mxu0
      %v1319 = vadd.f32 %v1269, %v1318
      %1320 = vmatmul.bf16.gmra.mxu0 %v1284
      %v1321 = vpop.f32.mrf.mxu0
      %v1322 = vadd.f32 %v1269, %v1321
      %v1323 = vpop.f32.mrf.mxu0
      %v1324 = vadd.f32 %v1269, %v1323
      %1325 = vmatmul.bf16.gmra.mxu0 %v1287
      %v1326 = vpop.f32.mrf.mxu0
      %v1327 = vadd.f32 %v1269, %v1326
      %v1328 = vpop.f32.mrf.mxu0
      %v1329 = vadd.f32 %v1269, %v1328
      %1330 = vmatmul.bf16.gmra.mxu0 %v1290
      %v1331 = vpop.f32.mrf.mxu0
      %v1332 = vadd.f32 %v1269, %v1331
      %v1333 = vpop.f32.mrf.mxu0
      %v1334 = vadd.f32 %v1269, %v1333
      %1335 = vmatmul.bf16.gmra.mxu0 %v1293
      %v1336 = vpop.f32.mrf.mxu0
      %v1337 = vadd.f32 %v1269, %v1336
      %v1338 = vpop.f32.mrf.mxu0
      %v1339 = vadd.f32 %v1269, %v1338
      %1340 = vmatmul.bf16.gmra.mxu0 %v1296
      %v1341 = vpop.f32.mrf.mxu0
      %v1342 = vadd.f32 %v1269, %v1341
      %v1343 = vpop.f32.mrf.mxu0
      %v1344 = vadd.f32 %v1269, %v1343
      %1345 = vmatmul.bf16.gmra.mxu0 %v1299
      %v1346 = vpop.f32.mrf.mxu0
      %v1347 = vadd.f32 %v1269, %v1346
      %v1348 = vpop.f32.mrf.mxu0
      %v1349 = vadd.f32 %v1269, %v1348
      %1350 = vmatmul.bf16.gmra.mxu0 %v1302
      %v1351 = vpop.f32.mrf.mxu0
      %v1352 = vadd.f32 %v1269, %v1351
      %v1353 = vpop.f32.mrf.mxu0
      %v1354 = vadd.f32 %v1269, %v1353
      %1355 = vdwg.mxu0
      %vm1356 = vcmp.gt.f32.partialorder %v1317, 0.0
      %vm1357 = vcmp.gt.f32.partialorder %v1319, 0.0
      %vm1358 = vcmp.gt.f32.partialorder %v1322, 0.0
      %vm1359 = vcmp.gt.f32.partialorder %v1324, 0.0
      %vm1360 = vcmp.gt.f32.partialorder %v1327, 0.0
      %vm1361 = vcmp.gt.f32.partialorder %v1329, 0.0
      %vm1362 = vcmp.gt.f32.partialorder %v1332, 0.0
      %vm1363 = vcmp.gt.f32.partialorder %v1334, 0.0
      %vm1364 = vcmp.gt.f32.partialorder %v1337, 0.0
      %vm1365 = vcmp.gt.f32.partialorder %v1339, 0.0
      %vm1366 = vcmp.gt.f32.partialorder %v1342, 0.0
      %vm1367 = vcmp.gt.f32.partialorder %v1344, 0.0
      %vm1368 = vcmp.gt.f32.partialorder %v1347, 0.0
      %vm1369 = vcmp.gt.f32.partialorder %v1349, 0.0
      %vm1370 = vcmp.gt.f32.partialorder %v1352, 0.0
      %vm1371 = vcmp.gt.f32.partialorder %v1354, 0.0
      %v1372 = vmul.f32 %v1317, 0.01
      %v1373 = vmul.f32 %v1319, 0.01
      %v1374 = vmul.f32 %v1322, 0.01
      %v1375 = vmul.f32 %v1324, 0.01
      %v1376 = vmul.f32 %v1327, 0.01
      %v1377 = vmul.f32 %v1329, 0.01
      %v1378 = vmul.f32 %v1332, 0.01
      %v1379 = vmul.f32 %v1334, 0.01
      %v1380 = vmul.f32 %v1337, 0.01
      %v1381 = vmul.f32 %v1339, 0.01
      %v1382 = vmul.f32 %v1342, 0.01
      %v1383 = vmul.f32 %v1344, 0.01
      %v1384 = vmul.f32 %v1347, 0.01
      %v1385 = vmul.f32 %v1349, 0.01
      %v1386 = vmul.f32 %v1352, 0.01
      %v1387 = vmul.f32 %v1354, 0.01
      %v1388 = vsel %vm1356, %v1317, %v1372
      %v1389 = vsel %vm1357, %v1319, %v1373
      %v1390 = vsel %vm1358, %v1322, %v1374
      %v1391 = vsel %vm1359, %v1324, %v1375
      %v1392 = vsel %vm1360, %v1327, %v1376
      %v1393 = vsel %vm1361, %v1329, %v1377
      %v1394 = vsel %vm1362, %v1332, %v1378
      %v1395 = vsel %vm1363, %v1334, %v1379
      %v1396 = vsel %vm1364, %v1337, %v1380
      %v1397 = vsel %vm1365, %v1339, %v1381
      %v1398 = vsel %vm1366, %v1342, %v1382
      %v1399 = vsel %vm1367, %v1344, %v1383
      %v1400 = vsel %vm1368, %v1347, %v1384
      %v1401 = vsel %vm1369, %v1349, %v1385
      %v1402 = vsel %vm1370, %v1352, %v1386
      %v1403 = vsel %vm1371, %v1354, %v1387
      %v1404 = vld [vmem:[%s11] sm:$0xf]
      %v1405 = vld [vmem:[%s11 + $0x4] sm:$0x1]
      %v1406 = vld [vmem:[#allocation2] sm:$0x1]
      %v1407 = vpack.c.bf16 %v1389, %v1388
      %v1408 = vpack.c.bf16 %v1391, %v1390
      %v1409 = vpack.c.bf16 %v1393, %v1392
      %v1410 = vpack.c.bf16 %v1395, %v1394
      %v1411 = vpack.c.bf16 %v1397, %v1396
      %v1412 = vpack.c.bf16 %v1399, %v1398
      %v1413 = vpack.c.bf16 %v1401, %v1400
      %v1414 = vpack.c.bf16 %v1403, %v1402
      %v1416 = vperm.slane %v1406, 0
      %v1420 = vunpack.c.l.b16 %v1404
      %v1421 = vunpack.c.l.b16 %v1405
      %v1422 = vpack.c.b16 %v1421, %v1420
      %vm1423 = vcmask 80896
      %v1425 = vsel %vm1423, %v1407, 0
      %v1428 = vsel %vm1423, %v1408, 0
      %v1431 = vsel %vm1423, %v1409, 0
      %v1434 = vsel %vm1423, %v1410, 0
      %v1437 = vsel %vm1423, %v1411, 0
      %v1440 = vsel %vm1423, %v1412, 0
      %v1443 = vsel %vm1423, %v1413, 0
      %v1446 = vsel %vm1423, %v1414, 0
      %vm1448 = vcmask 1044480
      %v1450 = vsel %vm1448, %v1422, 0
      %1452 = vmatpush.bf16.msra.mxu0 0
      %1453 = vmatpush.bf16.msra.mxu0 0
      %1454 = vmatpush.bf16.msra.mxu0 0
      %1455 = vmatpush.bf16.msra.mxu0 0
      %1456 = vmatpush.bf16.msra.mxu0 0
      %1457 = vmatpush.bf16.msra.mxu0 0
      %1458 = vmatpush.bf16.msra.mxu0 0
      %1459 = vmatpush.bf16.msra.mxu0 %v1450
      %1460 = vmatmul.bf16.gmra.mxu0 %v1425
      %v1461 = vpop.f32.mrf.mxu0
      %v1462 = vadd.f32 %v1416, %v1461
      %v1463 = vpop.f32.mrf.mxu0
      %v1464 = vadd.f32 %v1416, %v1463
      %1465 = vmatmul.bf16.gmra.mxu0 %v1428
      %v1466 = vpop.f32.mrf.mxu0
      %v1467 = vadd.f32 %v1416, %v1466
      %v1468 = vpop.f32.mrf.mxu0
      %v1469 = vadd.f32 %v1416, %v1468
      %1470 = vmatmul.bf16.gmra.mxu0 %v1431
      %v1471 = vpop.f32.mrf.mxu0
      %v1472 = vadd.f32 %v1416, %v1471
      %v1473 = vpop.f32.mrf.mxu0
      %v1474 = vadd.f32 %v1416, %v1473
      %1475 = vmatmul.bf16.gmra.mxu0 %v1434
      %v1476 = vpop.f32.mrf.mxu0
      %v1477 = vadd.f32 %v1416, %v1476
      %v1478 = vpop.f32.mrf.mxu0
      %v1479 = vadd.f32 %v1416, %v1478
      %1480 = vmatmul.bf16.gmra.mxu0 %v1437
      %v1481 = vpop.f32.mrf.mxu0
      %v1482 = vadd.f32 %v1416, %v1481
      %v1483 = vpop.f32.mrf.mxu0
      %v1484 = vadd.f32 %v1416, %v1483
      %1485 = vmatmul.bf16.gmra.mxu0 %v1440
      %v1486 = vpop.f32.mrf.mxu0
      %v1487 = vadd.f32 %v1416, %v1486
      %v1488 = vpop.f32.mrf.mxu0
      %v1489 = vadd.f32 %v1416, %v1488
      %1490 = vmatmul.bf16.gmra.mxu0 %v1443
      %v1491 = vpop.f32.mrf.mxu0
      %v1492 = vadd.f32 %v1416, %v1491
      %v1493 = vpop.f32.mrf.mxu0
      %v1494 = vadd.f32 %v1416, %v1493
      %1495 = vmatmul.bf16.gmra.mxu0 %v1446
      %v1496 = vpop.f32.mrf.mxu0
      %v1497 = vadd.f32 %v1416, %v1496
      %v1498 = vpop.f32.mrf.mxu0
      %v1499 = vadd.f32 %v1416, %v1498
      %1500 = vdwg.mxu0
      %vm1501 = vcmask 7168
      %1502 = vst.msk [vmem:[%s447] sm:$0xff] %vm1501, %v1462
      %1503 = vst.msk [vmem:[%s447 + $0x8] sm:$0xff] %vm1501, %v1464
      %1504 = vst.msk [vmem:[%s447 + $0x10] sm:$0xff] %vm1501, %v1467
      %1505 = vst.msk [vmem:[%s447 + $0x18] sm:$0xff] %vm1501, %v1469
      %1506 = vst.msk [vmem:[%s447 + $0x20] sm:$0xff] %vm1501, %v1472
      %1507 = vst.msk [vmem:[%s447 + $0x28] sm:$0xff] %vm1501, %v1474
      %1508 = vst.msk [vmem:[%s447 + $0x30] sm:$0xff] %vm1501, %v1477
      %1509 = vst.msk [vmem:[%s447 + $0x38] sm:$0xff] %vm1501, %v1479
      %1510 = vst.msk [vmem:[%s447 + $0x40] sm:$0xff] %vm1501, %v1482
      %1511 = vst.msk [vmem:[%s447 + $0x48] sm:$0xff] %vm1501, %v1484
      %1512 = vst.msk [vmem:[%s447 + $0x50] sm:$0xff] %vm1501, %v1487
      %1513 = vst.msk [vmem:[%s447 + $0x58] sm:$0xff] %vm1501, %v1489
      %1514 = vst.msk [vmem:[%s447 + $0x60] sm:$0xff] %vm1501, %v1492
      %1515 = vst.msk [vmem:[%s447 + $0x68] sm:$0xff] %vm1501, %v1494
      %1516 = vst.msk [vmem:[%s447 + $0x70] sm:$0xff] %vm1501, %v1497
      %1517 = vst.msk [vmem:[%s447 + $0x78] sm:$0xff] %vm1501, %v1499
      %s1518 = smul.u32 16, %s26
      %p1519 = scmp.lt.s32.totalorder %s1518, 63
      %s1520 = scalar_select %p1519, %s1518, 63
      %s1521 = smul.addr %s1520, 8
      %s1522 = scalar_lea.vmem %s13, %s1521
      // Predicated region
      $region73: #{multitask_mlp_forward.1} parent=71 // pred_check
        %p1523 = pneg %p322
      $region74: #{multitask_mlp_forward.1} parent=71 // pred_check_branch
        %1525 = sbr.rel (%p1523) target = $region76
      $region75: #{multitask_mlp_forward.1} parent=71 // pred_region
        %s1526 = smul.u32 16, %s26
      $region76: #{multitask_mlp_forward.1} parent=71 // pred_fallthru
        _
    $region72: #{multitask_mlp_forward.1} parent=5 // pred_fallthru
      _
    %p1527 = scmp.le.s32.totalorder 2, %s21
    // Predicated region
    $region77: #{multitask_mlp_forward.1} parent=5 // pred_check
      %p1528 = pneg %p1527
    $region78: #{multitask_mlp_forward.1} parent=5 // pred_check_branch
      %1530 = sbr.rel (%p1528) target = $region80
    $region79: #{multitask_mlp_forward.1} parent=5 // pred_region
      %s1531 = ssub.s32 %s21, 2
      // Predicated region
      $region81: #{multitask_mlp_forward.1} parent=79 // pred_check
        %p1532 = pneg %p328
      $region82: #{multitask_mlp_forward.1} parent=79 // pred_check_branch
        %1534 = sbr.rel (%p1532) target = $region84
      $region83: #{multitask_mlp_forward.1} parent=79 // pred_region
        %s1535 = smul.u32 16, %s27
        %p1536 = scmp.lt.s32.totalorder %s1535, 63
        %s1537 = scalar_select %p1536, %s1535, 63
        %s1538 = smul.addr %s1537, 8
        %s1539 = scalar_lea.vmem %s13, %s1538
      $region84: #{multitask_mlp_forward.1} parent=79 // pred_fallthru
        _
    $region80: #{multitask_mlp_forward.1} parent=5 // pred_fallthru
      _
  $region6: #{multitask_mlp_forward.1} parent=0 // loop_footer
    %s25 = sadd.s32 1, %s21
  $region7: #{multitask_mlp_forward.1} parent=0 // loop_footer_branch
    %20 = sbr.rel target = $region3
  $region8: #{multitask_mlp_forward.1} parent=0 // loop_exit
    _

</llo_original>
